<compile_context>
chip_gen: v7x
topology: tpu7x:2x2x1
jax: 0.10.0
libtpu: 0.0.40
codegen_flags: <defaults>
</compile_context>

<pallas_src>
import numpy as np
import jax
import jax.numpy as jnp
from jax.experimental import pallas as pl
from jax.experimental.pallas import tpu as pltpu

EPS = 1e-5
_HI = jax.lax.Precision.HIGHEST


def _make_kernel(N, H, W, Cin, Cout):
    WC1, WC2 = W * Cin, W * Cout
    R = H * N                     # interior rows, (h, n) order, h-major
    RP = (H // 2) * N             # pooled rows

    def relu_bn(pre, gamma_l, beta_l, tavg):
        """ReLU -> BatchNorm (training-mode batch stats, biased var) on (rows, W*C)."""
        act = jnp.maximum(pre, 0.0)
        sums = jnp.concatenate(
            [jnp.sum(act, axis=0, keepdims=True),
             jnp.sum(act * act, axis=0, keepdims=True)], axis=0)        # (2, W*C)
        stats = jnp.dot(sums, tavg, precision=_HI,
                        preferred_element_type=jnp.float32)             # (2, W*C)
        mean_l = stats[0:1, :]
        var_l = jnp.maximum(stats[1:2, :] - mean_l * mean_l, 0.0)       # E[x^2]-mean^2
        scale_l = gamma_l * jax.lax.rsqrt(var_l + EPS)
        shift_l = beta_l - mean_l * scale_l
        return act * scale_l + shift_l                                  # folded BN FMA

    def conv3(xv, w_ref):
        """3x3 SAME conv as 3 banded MXU matmuls; windows are contiguous row views."""
        acc = jnp.dot(xv[0:R, :], w_ref[0], preferred_element_type=jnp.float32)
        for kh in (1, 2):
            acc = acc + jnp.dot(xv[kh * N:kh * N + R, :], w_ref[kh],
                                preferred_element_type=jnp.float32)
        return acc

    def kernel(x_ref, w1_ref, b1_ref, g1_ref, bt1_ref,
               w2_ref, b2_ref, g2_ref, bt2_ref, tavg_ref,
               conv_ref, pool_ref, xv1, xv2):
        # ---------------- stage 1: Conv3x3(pad=1) -> ReLU -> BatchNorm ----------
        xv1[0:N, :] = jnp.zeros((N, WC1), xv1.dtype)              # top halo row only
        xv1[(H + 1) * N:(H + 2) * N, :] = jnp.zeros((N, WC1), xv1.dtype)
        xv1[N:(H + 1) * N, :] = x_ref[...]
        y1 = relu_bn(conv3(xv1, w1_ref) + b1_ref[...],
                     g1_ref[...], bt1_ref[...], tavg_ref[...])

        # ---------------- stage 2: Conv3x3(pad=1) -> ReLU -> BatchNorm ----------
        xv2[0:N, :] = jnp.zeros((N, WC2), xv2.dtype)
        xv2[(H + 1) * N:(H + 2) * N, :] = jnp.zeros((N, WC2), xv2.dtype)
        xv2[N:(H + 1) * N, :] = y1
        y2 = relu_bn(conv3(xv2, w2_ref) + b2_ref[...],
                     g2_ref[...], bt2_ref[...], tavg_ref[...])

        conv_ref[...] = y2.astype(conv_ref.dtype)                 # 128-lane unmasked store

        # ---------------- MaxPool2d(kernel_size=2, stride=2) --------------------
        yp = y2.reshape(H // 2, 2 * N, WC2)                       # group row pairs (h, h+1)
        rp = jnp.maximum(yp[:, :N, :], yp[:, N:, :]).reshape(RP, WC2)
        # Column pairs: XLU roll brings lane group w+1 onto w, then max. Even lane
        # groups hold the pooled columns; wrapped garbage lands in odd groups and is
        # discarded by the wrapper's even-group selection (layout plumbing only).
        rolled = pltpu.roll(rp, shift=WC2 - Cout, axis=1)
        pool_ref[...] = jnp.maximum(rp, rolled).astype(pool_ref.dtype)  # 128-lane store

    return kernel


def _banded_conv_mats(w_hwio, W):
    """(3, 3, Cin, Cout) HWIO kernel -> (3, W*Cin, W*Cout) banded matrices, one per
    kernel row kh. kw taps and horizontal SAME padding are folded into the band:
    B_kh[w_in*Cin + ci, w_out*Cout + co] = sum_kw W[kh,kw,ci,co] * [w_in == w_out + kw - 1].
    NOTE: band density is 3/W; for large W tile W or switch kw taps to lane rolls.
    """
    mats = []
    for kh in range(3):
        m = None
        for kw in range(3):
            d = kw - 1                                       # w_in = w_out + d
            shift = jnp.eye(W, k=-d, dtype=jnp.float32)      # [w_in == w_out + d]
            term = jnp.kron(shift, w_hwio[kh, kw].astype(jnp.float32))
            m = term if m is None else m + term
        mats.append(m)
    return jnp.stack(mats, axis=0)


def _tile_channel(v, W):
    """(C,) per-channel vector -> (1, W*C) lane vector tiled over the W groups."""
    return jnp.tile(v.astype(jnp.float32).reshape(1, -1), (1, W))


def downsampling_forward(x_nchw, params):
    """Matches DownSampling.forward: returns (max_pool(conv_out), conv_out) in NCHW."""
    (w1, b1, g1, bt1), (w2, b2, g2, bt2) = params
    N, Cin, H, W = x_nchw.shape
    Cout = int(w1.shape[-1])
    assert H % 2 == 0 and W % 2 == 0, "2x2/stride-2 max-pool path assumes even H, W"
    assert (W * Cout) % 128 == 0, "lane-dense layout assumes W*Cout is a multiple of 128"

    # NCHW -> h-major / n-minor lane-dense rows (H*N, W*Cin).
    x2d = jnp.transpose(x_nchw, (2, 0, 3, 1)).astype(jnp.float32).reshape(H * N, W * Cin)

    B1 = _banded_conv_mats(w1, W)                     # (3, W*Cin,  W*Cout)
    B2 = _banded_conv_mats(w2, W)                     # (3, W*Cout, W*Cout)
    # Channel-averaging matrix: (lane row-sum) @ tavg = per-channel mean, already
    # re-broadcast across the W lane groups (no relayout).
    tavg = jnp.asarray(np.kron(np.ones((W, W), np.float32),
                               np.eye(Cout, dtype=np.float32)) / float(N * H * W))

    # TODO(synk): for non-toy N*H*W, add an H-tiled grid (dimension_semantics=("parallel",...)
    # so v7x's two TensorCores split the rows) with per-tile BN partial sums (sum, sumsq)
    # and a finalize/apply pass, sizing tiles for v7x's 64 MiB VMEM and M,K >= 256 per
    # matmul on v6e/v7x (>=128 on v5e). Omitted at this toy size (whole batch fits VMEM).
    vmem = pl.BlockSpec(memory_space=pltpu.MemorySpace.VMEM)
    kernel = _make_kernel(N, H, W, Cin, Cout)
    conv2d, pool2d = pl.pallas_call(
        kernel,
        out_shape=(jax.ShapeDtypeStruct((H * N, W * Cout), jnp.float32),
                   jax.ShapeDtypeStruct(((H // 2) * N, W * Cout), jnp.float32)),
        in_specs=[vmem] * 10,
        out_specs=(vmem, vmem),
        scratch_shapes=[pltpu.VMEM(((H + 2) * N, W * Cin), jnp.float32),
                        pltpu.VMEM(((H + 2) * N, W * Cout), jnp.float32)],
        compiler_params=pltpu.CompilerParams(vmem_limit_bytes=32 * 1024 * 1024),
    )(x2d, B1, _tile_channel(b1, W), _tile_channel(g1, W), _tile_channel(bt1, W),
      B2, _tile_channel(b2, W), _tile_channel(g2, W), _tile_channel(bt2, W), tavg)

    conv_out = jnp.transpose(conv2d.reshape(H, N, W, Cout), (1, 3, 0, 2))
    pool_full = pool2d.reshape(H // 2, N, W // 2, 2, Cout)[:, :, :, 0, :]  # keep even w
    pooled = jnp.transpose(pool_full, (1, 3, 0, 2))
    return pooled, conv_out


def init_params(key, in_channels, out_channels, k=3):
    """Deterministic synthetic init (PyTorch-like uniform(-1/sqrt(fan_in), ...))."""
    k1, k2 = jax.random.split(key)

    def conv_init(kk, cin, cout):
        fan_in = cin * k * k
        bound = float(fan_in) ** -0.5
        kw_key, kb_key = jax.random.split(kk)
        w = jax.random.uniform(kw_key, (k, k, cin, cout), jnp.float32, -bound, bound)
        b = jax.random.uniform(kb_key, (cout,), jnp.float32, -bound, bound)
        return w, b

    w1, b1 = conv_init(k1, in_channels, out_channels)
    w2, b2 = conv_init(k2, out_channels, out_channels)
    g1 = jnp.ones((out_channels,), jnp.float32)
    bt1 = jnp.zeros((out_channels,), jnp.float32)
    g2 = jnp.ones((out_channels,), jnp.float32)
    bt2 = jnp.zeros((out_channels,), jnp.float32)
    return (w1, b1, g1, bt1), (w2, b2, g2, bt2)


def ref_forward(x_nchw, params):
    """Pure-JAX reference of the same math (for correctness check)."""
    (w1, b1, g1, bt1), (w2, b2, g2, bt2) = params
    x = jnp.transpose(x_nchw, (0, 2, 3, 1)).astype(jnp.float32)

    def conv(h, w, b):
        return jax.lax.conv_general_dilated(
            h, w, (1, 1), "SAME",
            dimension_numbers=("NHWC", "HWIO", "NHWC")) + b

    def bn(h, g, bt):
        m = jnp.mean(h, axis=(0, 1, 2), keepdims=True)
        v = jnp.mean((h - m) ** 2, axis=(0, 1, 2), keepdims=True)
        return (h - m) * jax.lax.rsqrt(v + EPS) * g + bt

    h1 = bn(jnp.maximum(conv(x, w1, b1), 0.0), g1, bt1)
    h2 = bn(jnp.maximum(conv(h1, w2, b2), 0.0), g2, bt2)
    N, H, W, C = h2.shape
    pool = jnp.max(h2.reshape(N, H // 2, 2, W // 2, 2, C), axis=(2, 4))
    return jnp.transpose(pool, (0, 3, 1, 2)), jnp.transpose(h2, (0, 3, 1, 2))


if __name__ == "__main__":
    key = jax.random.PRNGKey(0)
    pkey, xkey = jax.random.split(key)
    in_channels, out_channels = 4, 8
    params = init_params(pkey, in_channels, out_channels)

    x = jax.random.normal(xkey, (2, in_channels, 16, 16), jnp.float32)

    pooled, conv_out = jax.block_until_ready(downsampling_forward(x, params))
    ref_pooled, ref_conv = ref_forward(x, params)

    assert pooled.shape == (2, out_channels, 8, 8)
    assert conv_out.shape == (2, out_channels, 16, 16)
    assert jnp.allclose(pooled, ref_pooled, atol=2e-4, rtol=2e-4)
    assert jnp.allclose(conv_out, ref_conv, atol=2e-4, rtol=2e-4)
    print("KERNEL_OK")
</pallas_src>

<mosaic_0001>
module attributes {stable_mosaic.version = 11 : i64} {
  func.func @kernel(%arg0: memref<32x64xf32, #tpu.memory_space<vmem>>, %arg1: memref<3x64x128xf32, #tpu.memory_space<vmem>>, %arg2: memref<1x128xf32, #tpu.memory_space<vmem>>, %arg3: memref<1x128xf32, #tpu.memory_space<vmem>>, %arg4: memref<1x128xf32, #tpu.memory_space<vmem>>, %arg5: memref<3x128x128xf32, #tpu.memory_space<vmem>>, %arg6: memref<1x128xf32, #tpu.memory_space<vmem>>, %arg7: memref<1x128xf32, #tpu.memory_space<vmem>>, %arg8: memref<1x128xf32, #tpu.memory_space<vmem>>, %arg9: memref<128x128xf32, #tpu.memory_space<vmem>>, %arg10: memref<32x128xf32, #tpu.memory_space<vmem>>, %arg11: memref<16x128xf32, #tpu.memory_space<vmem>>, %arg12: memref<36x64xf32, #tpu.memory_space<vmem>>, %arg13: memref<36x128xf32, #tpu.memory_space<vmem>>) attributes {dimension_semantics = [], scalar_prefetch = 0 : i64, scratch_operands = 2 : i64, tpu.core_type = #tpu.core_type<tc>} {
    %cst = arith.constant 0.000000e+00 : f32
    %0 = vector.broadcast %cst : f32 to vector<2x64xf32>
    %c0 = arith.constant 0 : index
    %c0_0 = arith.constant 0 : index
    %1 = vector.load %arg12[%c0, %c0_0] : memref<36x64xf32, #tpu.memory_space<vmem>>, vector<2x64xf32>
    tpu.vector_store %arg12[%c0, %c0_0], %0 {strides = array<i32>} : memref<36x64xf32, #tpu.memory_space<vmem>>, vector<2x64xf32>,
    %cst_1 = arith.constant 0.000000e+00 : f32
    %2 = vector.broadcast %cst_1 : f32 to vector<2x64xf32>
    %c34 = arith.constant 34 : index
    %c0_2 = arith.constant 0 : index
    %3 = vector.load %arg12[%c34, %c0_2] : memref<36x64xf32, #tpu.memory_space<vmem>>, vector<2x64xf32>
    tpu.vector_store %arg12[%c34, %c0_2], %2 {strides = array<i32>} : memref<36x64xf32, #tpu.memory_space<vmem>>, vector<2x64xf32>,
    %c0_3 = arith.constant 0 : index
    %c0_4 = arith.constant 0 : index
    %4 = vector.load %arg0[%c0_3, %c0_4] : memref<32x64xf32, #tpu.memory_space<vmem>>, vector<32x64xf32>
    %c2 = arith.constant 2 : index
    %c0_5 = arith.constant 0 : index
    %5 = vector.load %arg12[%c2, %c0_5] : memref<36x64xf32, #tpu.memory_space<vmem>>, vector<32x64xf32>
    tpu.vector_store %arg12[%c2, %c0_5], %4 {strides = array<i32>} : memref<36x64xf32, #tpu.memory_space<vmem>>, vector<32x64xf32>,
    %c0_6 = arith.constant 0 : index
    %c0_7 = arith.constant 0 : index
    %6 = vector.load %arg12[%c0_6, %c0_7] : memref<36x64xf32, #tpu.memory_space<vmem>>, vector<32x64xf32>
    %c0_8 = arith.constant 0 : index
    %c0_9 = arith.constant 0 : index
    %c0_10 = arith.constant 0 : index
    %7 = vector.load %arg1[%c0_8, %c0_9, %c0_10] : memref<3x64x128xf32, #tpu.memory_space<vmem>>, vector<1x64x128xf32>
    %8 = vector.shape_cast %7 : vector<1x64x128xf32> to vector<64x128xf32>
    %cst_11 = arith.constant dense<0.000000e+00> : vector<32x128xf32>
    %9 = tpu.matmul %6, %8, %cst_11 {dimension_numbers = #tpu.dot_dimension_numbers<[1], [0], [0], [1], [0, 0, 1, 1], [], []>} : vector<32x64xf32>, vector<64x128xf32>, vector<32x128xf32> -> vector<32x128xf32>
    %c2_12 = arith.constant 2 : index
    %c0_13 = arith.constant 0 : index
    %10 = vector.load %arg12[%c2_12, %c0_13] : memref<36x64xf32, #tpu.memory_space<vmem>>, vector<32x64xf32>
    %c1 = arith.constant 1 : index
    %c0_14 = arith.constant 0 : index
    %c0_15 = arith.constant 0 : index
    %11 = vector.load %arg1[%c1, %c0_14, %c0_15] : memref<3x64x128xf32, #tpu.memory_space<vmem>>, vector<1x64x128xf32>
    %12 = vector.shape_cast %11 : vector<1x64x128xf32> to vector<64x128xf32>
    %cst_16 = arith.constant dense<0.000000e+00> : vector<32x128xf32>
    %13 = tpu.matmul %10, %12, %cst_16 {dimension_numbers = #tpu.dot_dimension_numbers<[1], [0], [0], [1], [0, 0, 1, 1], [], []>} : vector<32x64xf32>, vector<64x128xf32>, vector<32x128xf32> -> vector<32x128xf32>
    %14 = arith.addf %9, %13 : vector<32x128xf32>
    %c4 = arith.constant 4 : index
    %c0_17 = arith.constant 0 : index
    %15 = vector.load %arg12[%c4, %c0_17] : memref<36x64xf32, #tpu.memory_space<vmem>>, vector<32x64xf32>
    %c2_18 = arith.constant 2 : index
    %c0_19 = arith.constant 0 : index
    %c0_20 = arith.constant 0 : index
    %16 = vector.load %arg1[%c2_18, %c0_19, %c0_20] : memref<3x64x128xf32, #tpu.memory_space<vmem>>, vector<1x64x128xf32>
    %17 = vector.shape_cast %16 : vector<1x64x128xf32> to vector<64x128xf32>
    %cst_21 = arith.constant dense<0.000000e+00> : vector<32x128xf32>
    %18 = tpu.matmul %15, %17, %cst_21 {dimension_numbers = #tpu.dot_dimension_numbers<[1], [0], [0], [1], [0, 0, 1, 1], [], []>} : vector<32x64xf32>, vector<64x128xf32>, vector<32x128xf32> -> vector<32x128xf32>
    %19 = arith.addf %14, %18 : vector<32x128xf32>
    %c0_22 = arith.constant 0 : index
    %c0_23 = arith.constant 0 : index
    %20 = vector.load %arg2[%c0_22, %c0_23] : memref<1x128xf32, #tpu.memory_space<vmem>>, vector<1x128xf32>
    %21 = vector.broadcast %20 : vector<1x128xf32> to vector<32x128xf32>
    %22 = arith.addf %19, %21 : vector<32x128xf32>
    %c0_24 = arith.constant 0 : index
    %c0_25 = arith.constant 0 : index
    %23 = vector.load %arg3[%c0_24, %c0_25] : memref<1x128xf32, #tpu.memory_space<vmem>>, vector<1x128xf32>
    %c0_26 = arith.constant 0 : index
    %c0_27 = arith.constant 0 : index
    %24 = vector.load %arg4[%c0_26, %c0_27] : memref<1x128xf32, #tpu.memory_space<vmem>>, vector<1x128xf32>
    %c0_28 = arith.constant 0 : index
    %c0_29 = arith.constant 0 : index
    %25 = vector.load %arg9[%c0_28, %c0_29] : memref<128x128xf32, #tpu.memory_space<vmem>>, vector<128x128xf32>
    %cst_30 = arith.constant 0.000000e+00 : f32
    %26 = vector.broadcast %cst_30 : f32 to vector<32x128xf32>
    %27 = arith.maximumf %22, %26 : vector<32x128xf32>
    %cst_31 = arith.constant dense<0.000000e+00> : vector<128xf32>
    %28 = vector.multi_reduction <add>, %27, %cst_31 [0] : vector<32x128xf32> to vector<128xf32>
    %29 = vector.shape_cast %28 : vector<128xf32> to vector<1x128xf32>
    %30 = arith.mulf %27, %27 : vector<32x128xf32>
    %cst_32 = arith.constant dense<0.000000e+00> : vector<128xf32>
    %31 = vector.multi_reduction <add>, %30, %cst_32 [0] : vector<32x128xf32> to vector<128xf32>
    %32 = vector.shape_cast %31 : vector<128xf32> to vector<1x128xf32>
    %33 = tpu.concatenate %29, %32 in 0 : vector<1x128xf32>, vector<1x128xf32> -> vector<2x128xf32>
    %cst_33 = arith.constant dense<0.000000e+00> : vector<2x128xf32>
    %34 = tpu.matmul %33, %25, %cst_33 {dimension_numbers = #tpu.dot_dimension_numbers<[1], [0], [0], [1], [0, 0, 1, 1], [], []>, precision = #tpu.contract_precision<fp32>} : vector<2x128xf32>, vector<128x128xf32>, vector<2x128xf32> -> vector<2x128xf32>
    %35 = vector.extract_strided_slice %34 {offsets = [0, 0], sizes = [1, 128], strides = [1, 1]} : vector<2x128xf32> to vector<1x128xf32>
    %36 = vector.extract_strided_slice %34 {offsets = [1, 0], sizes = [1, 128], strides = [1, 1]} : vector<2x128xf32> to vector<1x128xf32>
    %37 = arith.mulf %35, %35 : vector<1x128xf32>
    %38 = arith.subf %36, %37 : vector<1x128xf32>
    %cst_34 = arith.constant 0.000000e+00 : f32
    %39 = vector.broadcast %cst_34 : f32 to vector<1x128xf32>
    %40 = arith.maximumf %38, %39 : vector<1x128xf32>
    %cst_35 = arith.constant 9.99999974E-6 : f32
    %41 = vector.broadcast %cst_35 : f32 to vector<1x128xf32>
    %42 = arith.addf %40, %41 : vector<1x128xf32>
    %43 = math.rsqrt %42 : vector<1x128xf32>
    %44 = arith.mulf %23, %43 : vector<1x128xf32>
    %45 = arith.mulf %35, %44 : vector<1x128xf32>
    %46 = arith.subf %24, %45 : vector<1x128xf32>
    %47 = vector.broadcast %44 : vector<1x128xf32> to vector<32x128xf32>
    %48 = arith.mulf %27, %47 : vector<32x128xf32>
    %49 = vector.broadcast %46 : vector<1x128xf32> to vector<32x128xf32>
    %50 = arith.addf %48, %49 : vector<32x128xf32>
    %cst_36 = arith.constant 0.000000e+00 : f32
    %51 = vector.broadcast %cst_36 : f32 to vector<2x128xf32>
    %c0_37 = arith.constant 0 : index
    %c0_38 = arith.constant 0 : index
    %52 = vector.load %arg13[%c0_37, %c0_38] : memref<36x128xf32, #tpu.memory_space<vmem>>, vector<2x128xf32>
    tpu.vector_store %arg13[%c0_37, %c0_38], %51 {strides = array<i32>} : memref<36x128xf32, #tpu.memory_space<vmem>>, vector<2x128xf32>,
    %cst_39 = arith.constant 0.000000e+00 : f32
    %53 = vector.broadcast %cst_39 : f32 to vector<2x128xf32>
    %c34_40 = arith.constant 34 : index
    %c0_41 = arith.constant 0 : index
    %54 = vector.load %arg13[%c34_40, %c0_41] : memref<36x128xf32, #tpu.memory_space<vmem>>, vector<2x128xf32>
    tpu.vector_store %arg13[%c34_40, %c0_41], %53 {strides = array<i32>} : memref<36x128xf32, #tpu.memory_space<vmem>>, vector<2x128xf32>,
    %c2_42 = arith.constant 2 : index
    %c0_43 = arith.constant 0 : index
    %55 = vector.load %arg13[%c2_42, %c0_43] : memref<36x128xf32, #tpu.memory_space<vmem>>, vector<32x128xf32>
    tpu.vector_store %arg13[%c2_42, %c0_43], %50 {strides = array<i32>} : memref<36x128xf32, #tpu.memory_space<vmem>>, vector<32x128xf32>,
    %c0_44 = arith.constant 0 : index
    %c0_45 = arith.constant 0 : index
    %56 = vector.load %arg13[%c0_44, %c0_45] : memref<36x128xf32, #tpu.memory_space<vmem>>, vector<32x128xf32>
    %c0_46 = arith.constant 0 : index
    %c0_47 = arith.constant 0 : index
    %c0_48 = arith.constant 0 : index
    %57 = vector.load %arg5[%c0_46, %c0_47, %c0_48] : memref<3x128x128xf32, #tpu.memory_space<vmem>>, vector<1x128x128xf32>
    %58 = vector.shape_cast %57 : vector<1x128x128xf32> to vector<128x128xf32>
    %cst_49 = arith.constant dense<0.000000e+00> : vector<32x128xf32>
    %59 = tpu.matmul %56, %58, %cst_49 {dimension_numbers = #tpu.dot_dimension_numbers<[1], [0], [0], [1], [0, 0, 1, 1], [], []>} : vector<32x128xf32>, vector<128x128xf32>, vector<32x128xf32> -> vector<32x128xf32>
    %c2_50 = arith.constant 2 : index
    %c0_51 = arith.constant 0 : index
    %60 = vector.load %arg13[%c2_50, %c0_51] : memref<36x128xf32, #tpu.memory_space<vmem>>, vector<32x128xf32>
    %c1_52 = arith.constant 1 : index
    %c0_53 = arith.constant 0 : index
    %c0_54 = arith.constant 0 : index
    %61 = vector.load %arg5[%c1_52, %c0_53, %c0_54] : memref<3x128x128xf32, #tpu.memory_space<vmem>>, vector<1x128x128xf32>
    %62 = vector.shape_cast %61 : vector<1x128x128xf32> to vector<128x128xf32>
    %cst_55 = arith.constant dense<0.000000e+00> : vector<32x128xf32>
    %63 = tpu.matmul %60, %62, %cst_55 {dimension_numbers = #tpu.dot_dimension_numbers<[1], [0], [0], [1], [0, 0, 1, 1], [], []>} : vector<32x128xf32>, vector<128x128xf32>, vector<32x128xf32> -> vector<32x128xf32>
    %64 = arith.addf %59, %63 : vector<32x128xf32>
    %c4_56 = arith.constant 4 : index
    %c0_57 = arith.constant 0 : index
    %65 = vector.load %arg13[%c4_56, %c0_57] : memref<36x128xf32, #tpu.memory_space<vmem>>, vector<32x128xf32>
    %c2_58 = arith.constant 2 : index
    %c0_59 = arith.constant 0 : index
    %c0_60 = arith.constant 0 : index
    %66 = vector.load %arg5[%c2_58, %c0_59, %c0_60] : memref<3x128x128xf32, #tpu.memory_space<vmem>>, vector<1x128x128xf32>
    %67 = vector.shape_cast %66 : vector<1x128x128xf32> to vector<128x128xf32>
    %cst_61 = arith.constant dense<0.000000e+00> : vector<32x128xf32>
    %68 = tpu.matmul %65, %67, %cst_61 {dimension_numbers = #tpu.dot_dimension_numbers<[1], [0], [0], [1], [0, 0, 1, 1], [], []>} : vector<32x128xf32>, vector<128x128xf32>, vector<32x128xf32> -> vector<32x128xf32>
    %69 = arith.addf %64, %68 : vector<32x128xf32>
    %c0_62 = arith.constant 0 : index
    %c0_63 = arith.constant 0 : index
    %70 = vector.load %arg6[%c0_62, %c0_63] : memref<1x128xf32, #tpu.memory_space<vmem>>, vector<1x128xf32>
    %71 = vector.broadcast %70 : vector<1x128xf32> to vector<32x128xf32>
    %72 = arith.addf %69, %71 : vector<32x128xf32>
    %c0_64 = arith.constant 0 : index
    %c0_65 = arith.constant 0 : index
    %73 = vector.load %arg7[%c0_64, %c0_65] : memref<1x128xf32, #tpu.memory_space<vmem>>, vector<1x128xf32>
    %c0_66 = arith.constant 0 : index
    %c0_67 = arith.constant 0 : index
    %74 = vector.load %arg8[%c0_66, %c0_67] : memref<1x128xf32, #tpu.memory_space<vmem>>, vector<1x128xf32>
    %c0_68 = arith.constant 0 : index
    %c0_69 = arith.constant 0 : index
    %75 = vector.load %arg9[%c0_68, %c0_69] : memref<128x128xf32, #tpu.memory_space<vmem>>, vector<128x128xf32>
    %cst_70 = arith.constant 0.000000e+00 : f32
    %76 = vector.broadcast %cst_70 : f32 to vector<32x128xf32>
    %77 = arith.maximumf %72, %76 : vector<32x128xf32>
    %cst_71 = arith.constant dense<0.000000e+00> : vector<128xf32>
    %78 = vector.multi_reduction <add>, %77, %cst_71 [0] : vector<32x128xf32> to vector<128xf32>
    %79 = vector.shape_cast %78 : vector<128xf32> to vector<1x128xf32>
    %80 = arith.mulf %77, %77 : vector<32x128xf32>
    %cst_72 = arith.constant dense<0.000000e+00> : vector<128xf32>
    %81 = vector.multi_reduction <add>, %80, %cst_72 [0] : vector<32x128xf32> to vector<128xf32>
    %82 = vector.shape_cast %81 : vector<128xf32> to vector<1x128xf32>
    %83 = tpu.concatenate %79, %82 in 0 : vector<1x128xf32>, vector<1x128xf32> -> vector<2x128xf32>
    %cst_73 = arith.constant dense<0.000000e+00> : vector<2x128xf32>
    %84 = tpu.matmul %83, %75, %cst_73 {dimension_numbers = #tpu.dot_dimension_numbers<[1], [0], [0], [1], [0, 0, 1, 1], [], []>, precision = #tpu.contract_precision<fp32>} : vector<2x128xf32>, vector<128x128xf32>, vector<2x128xf32> -> vector<2x128xf32>
    %85 = vector.extract_strided_slice %84 {offsets = [0, 0], sizes = [1, 128], strides = [1, 1]} : vector<2x128xf32> to vector<1x128xf32>
    %86 = vector.extract_strided_slice %84 {offsets = [1, 0], sizes = [1, 128], strides = [1, 1]} : vector<2x128xf32> to vector<1x128xf32>
    %87 = arith.mulf %85, %85 : vector<1x128xf32>
    %88 = arith.subf %86, %87 : vector<1x128xf32>
    %cst_74 = arith.constant 0.000000e+00 : f32
    %89 = vector.broadcast %cst_74 : f32 to vector<1x128xf32>
    %90 = arith.maximumf %88, %89 : vector<1x128xf32>
    %cst_75 = arith.constant 9.99999974E-6 : f32
    %91 = vector.broadcast %cst_75 : f32 to vector<1x128xf32>
    %92 = arith.addf %90, %91 : vector<1x128xf32>
    %93 = math.rsqrt %92 : vector<1x128xf32>
    %94 = arith.mulf %73, %93 : vector<1x128xf32>
    %95 = arith.mulf %85, %94 : vector<1x128xf32>
    %96 = arith.subf %74, %95 : vector<1x128xf32>
    %97 = vector.broadcast %94 : vector<1x128xf32> to vector<32x128xf32>
    %98 = arith.mulf %77, %97 : vector<32x128xf32>
    %99 = vector.broadcast %96 : vector<1x128xf32> to vector<32x128xf32>
    %100 = arith.addf %98, %99 : vector<32x128xf32>
    %c0_76 = arith.constant 0 : index
    %c0_77 = arith.constant 0 : index
    %101 = vector.load %arg10[%c0_76, %c0_77] : memref<32x128xf32, #tpu.memory_space<vmem>>, vector<32x128xf32>
    tpu.vector_store %arg10[%c0_76, %c0_77], %100 {strides = array<i32>} : memref<32x128xf32, #tpu.memory_space<vmem>>, vector<32x128xf32>,
    %102 = vector.shape_cast %100 : vector<32x128xf32> to vector<8x4x128xf32>
    %103 = vector.extract_strided_slice %102 {offsets = [0, 0, 0], sizes = [8, 2, 128], strides = [1, 1, 1]} : vector<8x4x128xf32> to vector<8x2x128xf32>
    %104 = vector.extract_strided_slice %102 {offsets = [0, 2, 0], sizes = [8, 2, 128], strides = [1, 1, 1]} : vector<8x4x128xf32> to vector<8x2x128xf32>
    %105 = arith.maximumf %103, %104 : vector<8x2x128xf32>
    %106 = vector.shape_cast %105 : vector<8x2x128xf32> to vector<16x128xf32>
    %c120_i32 = arith.constant 120 : i32
    %107 = tpu.dynamic_rotate %106 by %c120_i32 dim 1 : vector<16x128xf32>, i32 -> vector<16x128xf32>
    %108 = arith.maximumf %106, %107 : vector<16x128xf32>
    %c0_78 = arith.constant 0 : index
    %c0_79 = arith.constant 0 : index
    %109 = vector.load %arg11[%c0_78, %c0_79] : memref<16x128xf32, #tpu.memory_space<vmem>>, vector<16x128xf32>
    tpu.vector_store %arg11[%c0_78, %c0_79], %108 {strides = array<i32>} : memref<16x128xf32, #tpu.memory_space<vmem>>, vector<16x128xf32>,
    return
  }
}

</mosaic_0001>

<llo_original>
// kernel: tpu_custom_call.1
$region0: #{tpu_custom_call.1}
  #allocation0 [shape = 'u32[]', space=smem, size = 0x4, offset = 0x4, fixed_abs, tag = 'smem constant byte address 0x4 - core index']
  #allocation1 [shape = 'u32[144,128]{1,0:T(1,128)}', space=vmem, size = 0x12000, scoped, tag = 'internal scratch']
  #allocation2 [shape = 'f32[36,64]{1,0:T(8,128)}', space=vmem, size = 0x5000, scoped, tag = 'scratch operand']
  #allocation3 [shape = 'f32[36,128]{1,0:T(8,128)}', space=vmem, size = 0x5000, scoped, tag = 'scratch operand']
  %s0 = inlined_call_operand.hbm [shape: f32[32,64], index: 0, kind: input, shape index: {}]
  %s1 = inlined_call_operand.hbm [shape: f32[3,64,128], index: 1, kind: input, shape index: {}]
  %s2 = inlined_call_operand.vmem [shape: f32[1,128], index: 2, kind: input, shape index: {}]
  %s3 = inlined_call_operand.vmem [shape: f32[1,128], index: 3, kind: input, shape index: {}]
  %s4 = inlined_call_operand.vmem [shape: f32[1,128], index: 4, kind: input, shape index: {}]
  %s5 = inlined_call_operand.hbm [shape: f32[3,128,128], index: 5, kind: input, shape index: {}]
  %s6 = inlined_call_operand.vmem [shape: f32[1,128], index: 6, kind: input, shape index: {}]
  %s7 = inlined_call_operand.vmem [shape: f32[1,128], index: 7, kind: input, shape index: {}]
  %s8 = inlined_call_operand.vmem [shape: f32[1,128], index: 8, kind: input, shape index: {}]
  %s9 = inlined_call_operand.hbm [shape: f32[128,128], index: 9, kind: input, shape index: {}]
  %s10 = inlined_call_operand.hbm [shape: f32[32,128], index: 10, kind: output, shape index: {0}]
  %s11 = inlined_call_operand.hbm [shape: f32[16,128], index: 11, kind: output, shape index: {1}]
  %12 = xla_tuple %s10, %s11
  %s13 = sld [smem:[#allocation0]]
  $region74: #{tpu_custom_call.1} parent=0
    _
  %s15 = ssub.s32 1, %s13
  %s16 = scalar_select 0, %s15, %s13
  $region1: #{tpu_custom_call.1} parent=0
    #allocation4 [shape = 'u8[16384]{0}', space=vmem, size = 0x4000, scoped, tag = 'input window, operand 0, single buffered']
    #allocation5 [shape = 's32[1]{0}', space=sflag, size = 0x4, scoped, tag = 'scoped memory for tpu_custom_call.1']
    #allocation6 [shape = 's32[1]{0}', space=sflag, size = 0x4, scoped, tag = 'scoped memory for tpu_custom_call.1']
    #allocation7 [shape = 'u8[98304]{0}', space=vmem, size = 0x18000, scoped, tag = 'input window, operand 1, single buffered']
    #allocation8 [shape = 's32[1]{0}', space=sflag, size = 0x4, scoped, tag = 'scoped memory for tpu_custom_call.1']
    #allocation9 [shape = 'u8[196608]{0}', space=vmem, size = 0x30000, scoped, tag = 'input window, operand 5, single buffered']
    #allocation10 [shape = 'u8[65536]{0}', space=vmem, size = 0x10000, scoped, tag = 'input window, operand 9, single buffered']
    #allocation11 [shape = 's32[1]{0}', space=sflag, size = 0x4, scoped, tag = 'scoped memory for tpu_custom_call.1']
    #allocation12 [shape = 'u8[16384]{0}', space=vmem, size = 0x4000, scoped, tag = 'output window, operand 0, single buffered']
    #allocation13 [shape = 'u8[8192]{0}', space=vmem, size = 0x2000, scoped, tag = 'output window, operand 1, single buffered']
    #allocation14 [shape = 's32[1]{0}', space=sflag, size = 0x4, scoped, tag = 'scoped memory for tpu_custom_call.1']
    %17 = vsyncpa [#allocation5], 0
    %18 = vsyncpa [#allocation8], 0
    %19 = vsyncpa [#allocation11], 0
    %20 = vsyncpa [#allocation6], 0
    %21 = vsyncpa [#allocation14], 0
    // Predicated region
    $region2: #{tpu_custom_call.1} parent=1 // pred_check
      _
    $region3: #{tpu_custom_call.1} parent=1 // pred_check_branch
      %23 = sbr.rel (0) target = $region5
    $region4: #{tpu_custom_call.1} parent=1 // pred_region
      %s25 = ssub.s32 512, 512
      %26 = vsyncadd [#allocation5], %s25
      %s27 = sshll.u32 [#allocation4], 4
      %s28 = int_to_ptr.vmem [resolvable:$true] %s27
      %33 = dma.hbm_to_vmem [thread:$0]  %s0, 512, %s28, [#allocation5], 128, 128, 8
    $region5: #{tpu_custom_call.1} parent=1 // pred_fallthru
      _
    // Predicated region
    $region6: #{tpu_custom_call.1} parent=1 // pred_check
      _
    $region7: #{tpu_custom_call.1} parent=1 // pred_check_branch
      %35 = sbr.rel (0) target = $region9
    $region8: #{tpu_custom_call.1} parent=1 // pred_region
      %s37 = ssub.s32 3072, 3072
      %38 = vsyncadd [#allocation8], %s37
      %s39 = sshll.u32 [#allocation7], 4
      %s40 = int_to_ptr.vmem [resolvable:$true] %s39
      %45 = dma.hbm_to_vmem [thread:$0]  %s1, 3072, %s40, [#allocation8], 128, 128, 8
    $region9: #{tpu_custom_call.1} parent=1 // pred_fallthru
      _
    // Predicated region
    $region10: #{tpu_custom_call.1} parent=1 // pred_check
      _
    $region11: #{tpu_custom_call.1} parent=1 // pred_check_branch
      %47 = sbr.rel (0) target = $region13
    $region12: #{tpu_custom_call.1} parent=1 // pred_region
      _
    $region13: #{tpu_custom_call.1} parent=1 // pred_fallthru
      _
    // Predicated region
    $region14: #{tpu_custom_call.1} parent=1 // pred_check
      _
    $region15: #{tpu_custom_call.1} parent=1 // pred_check_branch
      %49 = sbr.rel (0) target = $region17
    $region16: #{tpu_custom_call.1} parent=1 // pred_region
      _
    $region17: #{tpu_custom_call.1} parent=1 // pred_fallthru
      _
    // Predicated region
    $region18: #{tpu_custom_call.1} parent=1 // pred_check
      _
    $region19: #{tpu_custom_call.1} parent=1 // pred_check_branch
      %51 = sbr.rel (0) target = $region21
    $region20: #{tpu_custom_call.1} parent=1 // pred_region
      _
    $region21: #{tpu_custom_call.1} parent=1 // pred_fallthru
      _
    // Predicated region
    $region22: #{tpu_custom_call.1} parent=1 // pred_check
      _
    $region23: #{tpu_custom_call.1} parent=1 // pred_check_branch
      %53 = sbr.rel (0) target = $region25
    $region24: #{tpu_custom_call.1} parent=1 // pred_region
      %s55 = ssub.s32 6144, 6144
      %56 = vsyncadd [#allocation8], %s55
      %s57 = sshll.u32 [#allocation9], 4
      %s58 = int_to_ptr.vmem [resolvable:$true] %s57
      %63 = dma.hbm_to_vmem [thread:$0]  %s5, 6144, %s58, [#allocation8], 128, 128, 8
    $region25: #{tpu_custom_call.1} parent=1 // pred_fallthru
      _
    // Predicated region
    $region26: #{tpu_custom_call.1} parent=1 // pred_check
      _
    $region27: #{tpu_custom_call.1} parent=1 // pred_check_branch
      %65 = sbr.rel (0) target = $region29
    $region28: #{tpu_custom_call.1} parent=1 // pred_region
      _
    $region29: #{tpu_custom_call.1} parent=1 // pred_fallthru
      _
    // Predicated region
    $region30: #{tpu_custom_call.1} parent=1 // pred_check
      _
    $region31: #{tpu_custom_call.1} parent=1 // pred_check_branch
      %67 = sbr.rel (0) target = $region33
    $region32: #{tpu_custom_call.1} parent=1 // pred_region
      _
    $region33: #{tpu_custom_call.1} parent=1 // pred_fallthru
      _
    // Predicated region
    $region34: #{tpu_custom_call.1} parent=1 // pred_check
      _
    $region35: #{tpu_custom_call.1} parent=1 // pred_check_branch
      %69 = sbr.rel (0) target = $region37
    $region36: #{tpu_custom_call.1} parent=1 // pred_region
      _
    $region37: #{tpu_custom_call.1} parent=1 // pred_fallthru
      _
    // Predicated region
    $region38: #{tpu_custom_call.1} parent=1 // pred_check
      _
    $region39: #{tpu_custom_call.1} parent=1 // pred_check_branch
      %71 = sbr.rel (0) target = $region41
    $region40: #{tpu_custom_call.1} parent=1 // pred_region
      %s73 = ssub.s32 2048, 2048
      %74 = vsyncadd [#allocation11], %s73
      %s75 = sshll.u32 [#allocation10], 4
      %s76 = int_to_ptr.vmem [resolvable:$true] %s75
      %81 = dma.hbm_to_vmem [thread:$0]  %s9, 2048, %s76, [#allocation11], 128, 128, 8
    $region41: #{tpu_custom_call.1} parent=1 // pred_fallthru
      _
    // Predicated region
    $region42: #{tpu_custom_call.1} parent=1 // pred_check
      _
    $region43: #{tpu_custom_call.1} parent=1 // pred_check_branch
      %83 = sbr.rel (0) target = $region45
    $region44: #{tpu_custom_call.1} parent=1 // pred_region
      %84 = dma.done [#allocation5], 512
    $region45: #{tpu_custom_call.1} parent=1 // pred_fallthru
      _
    // Predicated region
    $region46: #{tpu_custom_call.1} parent=1 // pred_check
      _
    $region47: #{tpu_custom_call.1} parent=1 // pred_check_branch
      %86 = sbr.rel (0) target = $region49
    $region48: #{tpu_custom_call.1} parent=1 // pred_region
      %87 = dma.done [#allocation8], 3072
    $region49: #{tpu_custom_call.1} parent=1 // pred_fallthru
      _
    // Predicated region
    $region50: #{tpu_custom_call.1} parent=1 // pred_check
      _
    $region51: #{tpu_custom_call.1} parent=1 // pred_check_branch
      %89 = sbr.rel (0) target = $region53
    $region52: #{tpu_custom_call.1} parent=1 // pred_region
      %90 = dma.done [#allocation8], 6144
    $region53: #{tpu_custom_call.1} parent=1 // pred_fallthru
      _
    // Predicated region
    $region54: #{tpu_custom_call.1} parent=1 // pred_check
      _
    $region55: #{tpu_custom_call.1} parent=1 // pred_check_branch
      %92 = sbr.rel (0) target = $region57
    $region56: #{tpu_custom_call.1} parent=1 // pred_region
      %93 = dma.done [#allocation11], 2048
    $region57: #{tpu_custom_call.1} parent=1 // pred_fallthru
      _
    %vm94 = vcmask 517120
    %95 = vst.msk [vmem:[#allocation2] sm:$0x3] %vm94, 0.0
    %96 = vst.msk [vmem:[#allocation2 + $0x22] sm:$0x3] %vm94, 0.0
    %v97 = vld [vmem:[#allocation4] sm:$0xff]
    %v98 = vld [vmem:[#allocation4 + $0x8] sm:$0xff]
    %v99 = vld [vmem:[#allocation4 + $0x10] sm:$0xff]
    %v100 = vld [vmem:[#allocation4 + $0x18] sm:$0xff]
    %vm101 = vcmask 523264
    %102 = vst.msk [vmem:[#allocation2 + $0x2] sm:$0xff] %vm101, %v97
    %103 = vst.msk [vmem:[#allocation2 + $0xa] sm:$0xff] %vm101, %v98
    %104 = vst.msk [vmem:[#allocation2 + $0x12] sm:$0xff] %vm101, %v99
    %105 = vst.msk [vmem:[#allocation2 + $0x1a] sm:$0xff] %vm101, %v100
    %v106 = vld [vmem:[#allocation2] sm:$0xff]
    %v107 = vld [vmem:[#allocation2 + $0x8] sm:$0xff]
    %v108 = vld [vmem:[#allocation2 + $0x10] sm:$0xff]
    %v109 = vld [vmem:[#allocation2 + $0x18] sm:$0xff]
    %v110 = vld [vmem:[#allocation7] sm:$0xff]
    %v111 = vld [vmem:[#allocation7 + $0x8] sm:$0xff]
    %v112 = vld [vmem:[#allocation7 + $0x10] sm:$0xff]
    %v113 = vld [vmem:[#allocation7 + $0x18] sm:$0xff]
    %v114 = vld [vmem:[#allocation7 + $0x20] sm:$0xff]
    %v115 = vld [vmem:[#allocation7 + $0x28] sm:$0xff]
    %v116 = vld [vmem:[#allocation7 + $0x30] sm:$0xff]
    %v117 = vld [vmem:[#allocation7 + $0x38] sm:$0xff]
    %v118 = vld [vmem:[#allocation2 + $0x2] sm:$0xff]
    %v119 = vld [vmem:[#allocation2 + $0xa] sm:$0xff]
    %v120 = vld [vmem:[#allocation2 + $0x12] sm:$0xff]
    %v121 = vld [vmem:[#allocation2 + $0x1a] sm:$0xff]
    %s122 = scalar_lea.vmem [#allocation7], 64
    %v123 = vld [vmem:[%s122] sm:$0xff]
    %v124 = vld [vmem:[%s122 + $0x8] sm:$0xff]
    %v125 = vld [vmem:[%s122 + $0x10] sm:$0xff]
    %v126 = vld [vmem:[%s122 + $0x18] sm:$0xff]
    %v127 = vld [vmem:[%s122 + $0x20] sm:$0xff]
    %v128 = vld [vmem:[%s122 + $0x28] sm:$0xff]
    %v129 = vld [vmem:[%s122 + $0x30] sm:$0xff]
    %v130 = vld [vmem:[%s122 + $0x38] sm:$0xff]
    %v132 = vsel %vm101, %v118, 0
    %v135 = vsel %vm101, %v119, 0
    %v138 = vsel %vm101, %v120, 0
    %v141 = vsel %vm101, %v121, 0
    %143 = vmatprep.subr.mxu0 0.0
    %144 = vmatpush1.msra.mxu0 %v123
    %145 = vmatprep.subr.mxu0 0.0
    %146 = vmatpush1.msra.mxu0 %v124
    %147 = vmatprep.subr.mxu0 0.0
    %148 = vmatpush1.msra.mxu0 %v125
    %149 = vmatprep.subr.mxu0 0.0
    %150 = vmatpush1.msra.mxu0 %v126
    %151 = vmatprep.subr.mxu0 0.0
    %152 = vmatpush1.msra.mxu0 %v127
    %153 = vmatprep.subr.mxu0 0.0
    %154 = vmatpush1.msra.mxu0 %v128
    %155 = vmatprep.subr.mxu0 0.0
    %156 = vmatpush1.msra.mxu0 %v129
    %157 = vmatprep.subr.mxu0 0.0
    %158 = vmatpush1.msra.mxu0 %v130
    %159 = vmatprep.subr.mxu0 0.0
    %160 = vmatpush1.msra.mxu0 0.0
    %161 = vmatprep.subr.mxu0 0.0
    %162 = vmatpush1.msra.mxu0 0.0
    %163 = vmatprep.subr.mxu0 0.0
    %164 = vmatpush1.msra.mxu0 0.0
    %165 = vmatprep.subr.mxu0 0.0
    %166 = vmatpush1.msra.mxu0 0.0
    %167 = vmatprep.subr.mxu0 0.0
    %168 = vmatpush1.msra.mxu0 0.0
    %169 = vmatprep.subr.mxu0 0.0
    %170 = vmatpush1.msra.mxu0 0.0
    %171 = vmatprep.subr.mxu0 0.0
    %172 = vmatpush1.msra.mxu0 0.0
    %173 = vmatprep.subr.mxu0 0.0
    %174 = vmatpush1.msra.mxu0 0.0
    %175 = vmatprep.subr.mxu0 0.0
    %176 = vmatpush1.msra.mxu0 0.0
    %177 = vmatprep.subr.mxu0 0.0
    %178 = vmatpush1.msra.mxu0 0.0
    %179 = vmatprep.subr.mxu0 0.0
    %180 = vmatpush1.msra.mxu0 0.0
    %181 = vmatprep.subr.mxu0 0.0
    %182 = vmatpush1.msra.mxu0 0.0
    %183 = vmatprep.subr.mxu0 0.0
    %184 = vmatpush1.msra.mxu0 0.0
    %185 = vmatprep.subr.mxu0 0.0
    %186 = vmatpush1.msra.mxu0 0.0
    %187 = vmatprep.subr.mxu0 0.0
    %188 = vmatpush1.msra.mxu0 0.0
    %189 = vmatprep.subr.mxu0 0.0
    %190 = vmatpush1.msra.mxu0 0.0
    %191 = vmatprep.subr.mxu0 0.0
    %192 = vmatpush1.msra.mxu0 0.0
    %193 = vmatprep.subr.mxu0 0.0
    %194 = vmatpush1.msra.mxu0 0.0
    %195 = vmatprep.subr.mxu0 0.0
    %196 = vmatpush1.msra.mxu0 0.0
    %197 = vmatprep.subr.mxu0 0.0
    %198 = vmatpush1.msra.mxu0 0.0
    %199 = vmatprep.subr.mxu0 0.0
    %200 = vmatpush1.msra.mxu0 0.0
    %201 = vmatprep.subr.mxu0 0.0
    %202 = vmatpush1.msra.mxu0 0.0
    %203 = vmatprep.subr.mxu0 0.0
    %204 = vmatpush1.msra.mxu0 0.0
    %205 = vmatprep.subr.mxu0 0.0
    %206 = vmatpush1.msra.mxu0 0.0
    %207 = vmatprep.mubr.f32.mxu0 0.0
    %208 = vmatmul.mubr.f32.gmra.mrb[0].mxu0 %v132
    %v209 = vpop.f32.mrb[0].mxu0
    %v210 = vadd.f32 0.0, %v209
    %v211 = vpop.f32.mrb[0].mxu0
    %212 = vmatprep.mubr.f32.mxu0 0.0
    %213 = vmatmul.mubr.f32.gmra.mrb[0].mxu0 %v135
    %v214 = vpop.f32.mrb[0].mxu0
    %v215 = vadd.f32 0.0, %v214
    %v216 = vpop.f32.mrb[0].mxu0
    %217 = vmatprep.mubr.f32.mxu0 0.0
    %218 = vmatmul.mubr.f32.gmra.mrb[0].mxu0 %v138
    %v219 = vpop.f32.mrb[0].mxu0
    %v220 = vadd.f32 0.0, %v219
    %v221 = vpop.f32.mrb[0].mxu0
    %222 = vmatprep.mubr.f32.mxu0 0.0
    %223 = vmatmul.mubr.f32.gmra.mrb[0].mxu0 %v141
    %v224 = vpop.f32.mrb[0].mxu0
    %v225 = vadd.f32 0.0, %v224
    %v226 = vpop.f32.mrb[0].mxu0
    %227 = vdwg.mxu0
    %v229 = vsel %vm101, %v106, 0
    %v232 = vsel %vm101, %v107, 0
    %v235 = vsel %vm101, %v108, 0
    %v238 = vsel %vm101, %v109, 0
    %240 = vmatprep.subr.mxu0 0.0
    %241 = vmatpush1.msra.mxu0 %v110
    %242 = vmatprep.subr.mxu0 0.0
    %243 = vmatpush1.msra.mxu0 %v111
    %244 = vmatprep.subr.mxu0 0.0
    %245 = vmatpush1.msra.mxu0 %v112
    %246 = vmatprep.subr.mxu0 0.0
    %247 = vmatpush1.msra.mxu0 %v113
    %248 = vmatprep.subr.mxu0 0.0
    %249 = vmatpush1.msra.mxu0 %v114
    %250 = vmatprep.subr.mxu0 0.0
    %251 = vmatpush1.msra.mxu0 %v115
    %252 = vmatprep.subr.mxu0 0.0
    %253 = vmatpush1.msra.mxu0 %v116
    %254 = vmatprep.subr.mxu0 0.0
    %255 = vmatpush1.msra.mxu0 %v117
    %256 = vmatprep.subr.mxu0 0.0
    %257 = vmatpush1.msra.mxu0 0.0
    %258 = vmatprep.subr.mxu0 0.0
    %259 = vmatpush1.msra.mxu0 0.0
    %260 = vmatprep.subr.mxu0 0.0
    %261 = vmatpush1.msra.mxu0 0.0
    %262 = vmatprep.subr.mxu0 0.0
    %263 = vmatpush1.msra.mxu0 0.0
    %264 = vmatprep.subr.mxu0 0.0
    %265 = vmatpush1.msra.mxu0 0.0
    %266 = vmatprep.subr.mxu0 0.0
    %267 = vmatpush1.msra.mxu0 0.0
    %268 = vmatprep.subr.mxu0 0.0
    %269 = vmatpush1.msra.mxu0 0.0
    %270 = vmatprep.subr.mxu0 0.0
    %271 = vmatpush1.msra.mxu0 0.0
    %272 = vmatprep.subr.mxu0 0.0
    %273 = vmatpush1.msra.mxu0 0.0
    %274 = vmatprep.subr.mxu0 0.0
    %275 = vmatpush1.msra.mxu0 0.0
    %276 = vmatprep.subr.mxu0 0.0
    %277 = vmatpush1.msra.mxu0 0.0
    %278 = vmatprep.subr.mxu0 0.0
    %279 = vmatpush1.msra.mxu0 0.0
    %280 = vmatprep.subr.mxu0 0.0
    %281 = vmatpush1.msra.mxu0 0.0
    %282 = vmatprep.subr.mxu0 0.0
    %283 = vmatpush1.msra.mxu0 0.0
    %284 = vmatprep.subr.mxu0 0.0
    %285 = vmatpush1.msra.mxu0 0.0
    %286 = vmatprep.subr.mxu0 0.0
    %287 = vmatpush1.msra.mxu0 0.0
    %288 = vmatprep.subr.mxu0 0.0
    %289 = vmatpush1.msra.mxu0 0.0
    %290 = vmatprep.subr.mxu0 0.0
    %291 = vmatpush1.msra.mxu0 0.0
    %292 = vmatprep.subr.mxu0 0.0
    %293 = vmatpush1.msra.mxu0 0.0
    %294 = vmatprep.subr.mxu0 0.0
    %295 = vmatpush1.msra.mxu0 0.0
    %296 = vmatprep.subr.mxu0 0.0
    %297 = vmatpush1.msra.mxu0 0.0
    %298 = vmatprep.subr.mxu0 0.0
    %299 = vmatpush1.msra.mxu0 0.0
    %300 = vmatprep.subr.mxu0 0.0
    %301 = vmatpush1.msra.mxu0 0.0
    %302 = vmatprep.subr.mxu0 0.0
    %303 = vmatpush1.msra.mxu0 0.0
    %304 = vmatprep.mubr.f32.mxu0 0.0
    %305 = vmatmul.mubr.f32.gmra.mrb[0].mxu0 %v229
    %v306 = vpop.f32.mrb[0].mxu0
    %v307 = vadd.f32 %v210, %v306
    %v308 = vpop.f32.mrb[0].mxu0
    %309 = vmatprep.mubr.f32.mxu0 0.0
    %310 = vmatmul.mubr.f32.gmra.mrb[0].mxu0 %v232
    %v311 = vpop.f32.mrb[0].mxu0
    %v312 = vadd.f32 %v215, %v311
    %v313 = vpop.f32.mrb[0].mxu0
    %314 = vmatprep.mubr.f32.mxu0 0.0
    %315 = vmatmul.mubr.f32.gmra.mrb[0].mxu0 %v235
    %v316 = vpop.f32.mrb[0].mxu0
    %v317 = vadd.f32 %v220, %v316
    %v318 = vpop.f32.mrb[0].mxu0
    %319 = vmatprep.mubr.f32.mxu0 0.0
    %320 = vmatmul.mubr.f32.gmra.mrb[0].mxu0 %v238
    %v321 = vpop.f32.mrb[0].mxu0
    %v322 = vadd.f32 %v225, %v321
    %v323 = vpop.f32.mrb[0].mxu0
    %324 = vdwg.mxu0
    %v325 = vld [vmem:[#allocation2 + $0x4] sm:$0xff]
    %v326 = vld [vmem:[#allocation2 + $0xc] sm:$0xff]
    %v327 = vld [vmem:[#allocation2 + $0x14] sm:$0xff]
    %v328 = vld [vmem:[#allocation2 + $0x1c] sm:$0xff]
    %s329 = scalar_lea.vmem [#allocation7], 128
    %v330 = vld [vmem:[%s329] sm:$0xff]
    %v331 = vld [vmem:[%s329 + $0x8] sm:$0xff]
    %v332 = vld [vmem:[%s329 + $0x10] sm:$0xff]
    %v333 = vld [vmem:[%s329 + $0x18] sm:$0xff]
    %v334 = vld [vmem:[%s329 + $0x20] sm:$0xff]
    %v335 = vld [vmem:[%s329 + $0x28] sm:$0xff]
    %v336 = vld [vmem:[%s329 + $0x30] sm:$0xff]
    %v337 = vld [vmem:[%s329 + $0x38] sm:$0xff]
    %v339 = vsel %vm101, %v325, 0
    %v342 = vsel %vm101, %v326, 0
    %v345 = vsel %vm101, %v327, 0
    %v348 = vsel %vm101, %v328, 0
    %350 = vmatprep.subr.mxu0 0.0
    %351 = vmatpush1.msra.mxu0 %v330
    %352 = vmatprep.subr.mxu0 0.0
    %353 = vmatpush1.msra.mxu0 %v331
    %354 = vmatprep.subr.mxu0 0.0
    %355 = vmatpush1.msra.mxu0 %v332
    %356 = vmatprep.subr.mxu0 0.0
    %357 = vmatpush1.msra.mxu0 %v333
    %358 = vmatprep.subr.mxu0 0.0
    %359 = vmatpush1.msra.mxu0 %v334
    %360 = vmatprep.subr.mxu0 0.0
    %361 = vmatpush1.msra.mxu0 %v335
    %362 = vmatprep.subr.mxu0 0.0
    %363 = vmatpush1.msra.mxu0 %v336
    %364 = vmatprep.subr.mxu0 0.0
    %365 = vmatpush1.msra.mxu0 %v337
    %366 = vmatprep.subr.mxu0 0.0
    %367 = vmatpush1.msra.mxu0 0.0
    %368 = vmatprep.subr.mxu0 0.0
    %369 = vmatpush1.msra.mxu0 0.0
    %370 = vmatprep.subr.mxu0 0.0
    %371 = vmatpush1.msra.mxu0 0.0
    %372 = vmatprep.subr.mxu0 0.0
    %373 = vmatpush1.msra.mxu0 0.0
    %374 = vmatprep.subr.mxu0 0.0
    %375 = vmatpush1.msra.mxu0 0.0
    %376 = vmatprep.subr.mxu0 0.0
    %377 = vmatpush1.msra.mxu0 0.0
    %378 = vmatprep.subr.mxu0 0.0
    %379 = vmatpush1.msra.mxu0 0.0
    %380 = vmatprep.subr.mxu0 0.0
    %381 = vmatpush1.msra.mxu0 0.0
    %382 = vmatprep.subr.mxu0 0.0
    %383 = vmatpush1.msra.mxu0 0.0
    %384 = vmatprep.subr.mxu0 0.0
    %385 = vmatpush1.msra.mxu0 0.0
    %386 = vmatprep.subr.mxu0 0.0
    %387 = vmatpush1.msra.mxu0 0.0
    %388 = vmatprep.subr.mxu0 0.0
    %389 = vmatpush1.msra.mxu0 0.0
    %390 = vmatprep.subr.mxu0 0.0
    %391 = vmatpush1.msra.mxu0 0.0
    %392 = vmatprep.subr.mxu0 0.0
    %393 = vmatpush1.msra.mxu0 0.0
    %394 = vmatprep.subr.mxu0 0.0
    %395 = vmatpush1.msra.mxu0 0.0
    %396 = vmatprep.subr.mxu0 0.0
    %397 = vmatpush1.msra.mxu0 0.0
    %398 = vmatprep.subr.mxu0 0.0
    %399 = vmatpush1.msra.mxu0 0.0
    %400 = vmatprep.subr.mxu0 0.0
    %401 = vmatpush1.msra.mxu0 0.0
    %402 = vmatprep.subr.mxu0 0.0
    %403 = vmatpush1.msra.mxu0 0.0
    %404 = vmatprep.subr.mxu0 0.0
    %405 = vmatpush1.msra.mxu0 0.0
    %406 = vmatprep.subr.mxu0 0.0
    %407 = vmatpush1.msra.mxu0 0.0
    %408 = vmatprep.subr.mxu0 0.0
    %409 = vmatpush1.msra.mxu0 0.0
    %410 = vmatprep.subr.mxu0 0.0
    %411 = vmatpush1.msra.mxu0 0.0
    %412 = vmatprep.subr.mxu0 0.0
    %413 = vmatpush1.msra.mxu0 0.0
    %414 = vmatprep.mubr.f32.mxu0 0.0
    %415 = vmatmul.mubr.f32.gmra.mrb[0].mxu0 %v339
    %v416 = vpop.f32.mrb[0].mxu0
    %v417 = vadd.f32 0.0, %v416
    %v418 = vpop.f32.mrb[0].mxu0
    %419 = vmatprep.mubr.f32.mxu0 0.0
    %420 = vmatmul.mubr.f32.gmra.mrb[0].mxu0 %v342
    %v421 = vpop.f32.mrb[0].mxu0
    %v422 = vadd.f32 0.0, %v421
    %v423 = vpop.f32.mrb[0].mxu0
    %424 = vmatprep.mubr.f32.mxu0 0.0
    %425 = vmatmul.mubr.f32.gmra.mrb[0].mxu0 %v345
    %v426 = vpop.f32.mrb[0].mxu0
    %v427 = vadd.f32 0.0, %v426
    %v428 = vpop.f32.mrb[0].mxu0
    %429 = vmatprep.mubr.f32.mxu0 0.0
    %430 = vmatmul.mubr.f32.gmra.mrb[0].mxu0 %v348
    %v431 = vpop.f32.mrb[0].mxu0
    %v432 = vadd.f32 0.0, %v431
    %v433 = vpop.f32.mrb[0].mxu0
    %434 = vdwg.mxu0
    %v435 = vadd.f32 %v307, %v417
    %v436 = vadd.f32 %v312, %v422
    %v437 = vadd.f32 %v317, %v427
    %v438 = vadd.f32 %v322, %v432
    %v439 = vld [vmem:[%s2] sm:$0x1]
    %v441 = vlaneseq
    %v442 = vshrl.u32 %v441, 7
    %v443 = vsub.s32 0, %v442
    %v444 = vrot.slane %v439, %v443
    %v446 = vadd.f32 %v435, %v444
    %v447 = vadd.f32 %v436, %v444
    %v448 = vadd.f32 %v437, %v444
    %v449 = vadd.f32 %v438, %v444
    %v450 = vld [vmem:[%s3] sm:$0x1]
    %v451 = vld [vmem:[%s4] sm:$0x1]
    %v452 = vld [vmem:[#allocation10] sm:$0xff]
    %v453 = vld [vmem:[#allocation10 + $0x8] sm:$0xff]
    %v454 = vld [vmem:[#allocation10 + $0x10] sm:$0xff]
    %v455 = vld [vmem:[#allocation10 + $0x18] sm:$0xff]
    %v456 = vld [vmem:[#allocation10 + $0x20] sm:$0xff]
    %v457 = vld [vmem:[#allocation10 + $0x28] sm:$0xff]
    %v458 = vld [vmem:[#allocation10 + $0x30] sm:$0xff]
    %v459 = vld [vmem:[#allocation10 + $0x38] sm:$0xff]
    %v460 = vld [vmem:[#allocation10 + $0x40] sm:$0xff]
    %v461 = vld [vmem:[#allocation10 + $0x48] sm:$0xff]
    %v462 = vld [vmem:[#allocation10 + $0x50] sm:$0xff]
    %v463 = vld [vmem:[#allocation10 + $0x58] sm:$0xff]
    %v464 = vld [vmem:[#allocation10 + $0x60] sm:$0xff]
    %v465 = vld [vmem:[#allocation10 + $0x68] sm:$0xff]
    %v466 = vld [vmem:[#allocation10 + $0x70] sm:$0xff]
    %v467 = vld [vmem:[#allocation10 + $0x78] sm:$0xff]
    %v468 = vmax.f32 %v446, 0.0
    %v469 = vmax.f32 %v447, 0.0
    %v470 = vmax.f32 %v448, 0.0
    %v471 = vmax.f32 %v449, 0.0
    %v472 = vadd.f32 %v468, %v469
    %v473 = vadd.f32 %v472, %v470
    %v474 = vadd.f32 %v473, %v471
    %v475 = vrot.slane %v474, 4
    %v476 = vadd.f32 %v474, %v475
    %v477 = vrot.slane %v476, 2
    %v478 = vadd.f32 %v476, %v477
    %v479 = vrot.slane %v478, 1
    %v480 = vadd.f32 %v478, %v479
    %v481 = vmul.f32 %v468, %v468
    %v482 = vmul.f32 %v469, %v469
    %v483 = vmul.f32 %v470, %v470
    %v484 = vmul.f32 %v471, %v471
    %v485 = vadd.f32 %v481, %v482
    %v486 = vadd.f32 %v485, %v483
    %v487 = vadd.f32 %v486, %v484
    %v488 = vrot.slane %v487, 4
    %v489 = vadd.f32 %v487, %v488
    %v490 = vrot.slane %v489, 2
    %v491 = vadd.f32 %v489, %v490
    %v492 = vrot.slane %v491, 1
    %v493 = vadd.f32 %v491, %v492
    %vm494 = vcmask 1040384
    %v495 = vsel %vm494, %v480, %v493
    %496 = vmatprep.subr.mxu0 0.0
    %v497 = vand.u32 %v452, 4294901760
    %498 = vmatpush1.msra.mxu0 %v497
    %499 = vmatprep.subr.mxu0 0.0
    %v500 = vand.u32 %v453, 4294901760
    %501 = vmatpush1.msra.mxu0 %v500
    %502 = vmatprep.subr.mxu0 0.0
    %v503 = vand.u32 %v454, 4294901760
    %504 = vmatpush1.msra.mxu0 %v503
    %505 = vmatprep.subr.mxu0 0.0
    %v506 = vand.u32 %v455, 4294901760
    %507 = vmatpush1.msra.mxu0 %v506
    %508 = vmatprep.subr.mxu0 0.0
    %v509 = vand.u32 %v456, 4294901760
    %510 = vmatpush1.msra.mxu0 %v509
    %511 = vmatprep.subr.mxu0 0.0
    %v512 = vand.u32 %v457, 4294901760
    %513 = vmatpush1.msra.mxu0 %v512
    %514 = vmatprep.subr.mxu0 0.0
    %v515 = vand.u32 %v458, 4294901760
    %516 = vmatpush1.msra.mxu0 %v515
    %517 = vmatprep.subr.mxu0 0.0
    %v518 = vand.u32 %v459, 4294901760
    %519 = vmatpush1.msra.mxu0 %v518
    %520 = vmatprep.subr.mxu0 0.0
    %v521 = vand.u32 %v460, 4294901760
    %522 = vmatpush1.msra.mxu0 %v521
    %523 = vmatprep.subr.mxu0 0.0
    %v524 = vand.u32 %v461, 4294901760
    %525 = vmatpush1.msra.mxu0 %v524
    %526 = vmatprep.subr.mxu0 0.0
    %v527 = vand.u32 %v462, 4294901760
    %528 = vmatpush1.msra.mxu0 %v527
    %529 = vmatprep.subr.mxu0 0.0
    %v530 = vand.u32 %v463, 4294901760
    %531 = vmatpush1.msra.mxu0 %v530
    %532 = vmatprep.subr.mxu0 0.0
    %v533 = vand.u32 %v464, 4294901760
    %534 = vmatpush1.msra.mxu0 %v533
    %535 = vmatprep.subr.mxu0 0.0
    %v536 = vand.u32 %v465, 4294901760
    %537 = vmatpush1.msra.mxu0 %v536
    %538 = vmatprep.subr.mxu0 0.0
    %v539 = vand.u32 %v466, 4294901760
    %540 = vmatpush1.msra.mxu0 %v539
    %541 = vmatprep.subr.mxu0 0.0
    %v542 = vand.u32 %v467, 4294901760
    %543 = vmatpush1.msra.mxu0 %v542
    %544 = vmatprep.subr.mxu0 0.0
    %545 = vmatpush1.msra.mxu0 0.0
    %546 = vmatprep.subr.mxu0 0.0
    %547 = vmatpush1.msra.mxu0 0.0
    %548 = vmatprep.subr.mxu0 0.0
    %549 = vmatpush1.msra.mxu0 0.0
    %550 = vmatprep.subr.mxu0 0.0
    %551 = vmatpush1.msra.mxu0 0.0
    %552 = vmatprep.subr.mxu0 0.0
    %553 = vmatpush1.msra.mxu0 0.0
    %554 = vmatprep.subr.mxu0 0.0
    %555 = vmatpush1.msra.mxu0 0.0
    %556 = vmatprep.subr.mxu0 0.0
    %557 = vmatpush1.msra.mxu0 0.0
    %558 = vmatprep.subr.mxu0 0.0
    %559 = vmatpush1.msra.mxu0 0.0
    %560 = vmatprep.subr.mxu0 0.0
    %561 = vmatpush1.msra.mxu0 0.0
    %562 = vmatprep.subr.mxu0 0.0
    %563 = vmatpush1.msra.mxu0 0.0
    %564 = vmatprep.subr.mxu0 0.0
    %565 = vmatpush1.msra.mxu0 0.0
    %566 = vmatprep.subr.mxu0 0.0
    %567 = vmatpush1.msra.mxu0 0.0
    %568 = vmatprep.subr.mxu0 0.0
    %569 = vmatpush1.msra.mxu0 0.0
    %570 = vmatprep.subr.mxu0 0.0
    %571 = vmatpush1.msra.mxu0 0.0
    %572 = vmatprep.subr.mxu0 0.0
    %573 = vmatpush1.msra.mxu0 0.0
    %574 = vmatprep.subr.mxu0 0.0
    %575 = vmatpush1.msra.mxu0 0.0
    %576 = vmatprep.mubr.f32.mxu0 0.0
    %v577 = vand.u32 %v495, 4294901760
    %v578 = vsub.f32 %v495, %v577
    %v579 = vand.u32 %v578, 4294901760
    %v580 = vsub.f32 %v578, %v579
    %v581 = vand.u32 %v580, 4294901760
    %582 = vmatmul.mubr.f32.gmra.mrb[0].mxu0 %v581
    %v583 = vpop.f32.mrb[0].mxu0
    %v584 = vadd.f32 0.0, %v583
    %v585 = vpop.f32.mrb[0].mxu0
    %586 = vdwg.mxu0
    %587 = vmatprep.subr.mxu0 0.0
    %v588 = vand.u32 %v452, 4294901760
    %v589 = vsub.f32 %v452, %v588
    %v590 = vand.u32 %v589, 4294901760
    %v591 = vsub.f32 %v589, %v590
    %v592 = vand.u32 %v591, 4294901760
    %593 = vmatpush1.msra.mxu0 %v592
    %594 = vmatprep.subr.mxu0 0.0
    %v595 = vand.u32 %v453, 4294901760
    %v596 = vsub.f32 %v453, %v595
    %v597 = vand.u32 %v596, 4294901760
    %v598 = vsub.f32 %v596, %v597
    %v599 = vand.u32 %v598, 4294901760
    %600 = vmatpush1.msra.mxu0 %v599
    %601 = vmatprep.subr.mxu0 0.0
    %v602 = vand.u32 %v454, 4294901760
    %v603 = vsub.f32 %v454, %v602
    %v604 = vand.u32 %v603, 4294901760
    %v605 = vsub.f32 %v603, %v604
    %v606 = vand.u32 %v605, 4294901760
    %607 = vmatpush1.msra.mxu0 %v606
    %608 = vmatprep.subr.mxu0 0.0
    %v609 = vand.u32 %v455, 4294901760
    %v610 = vsub.f32 %v455, %v609
    %v611 = vand.u32 %v610, 4294901760
    %v612 = vsub.f32 %v610, %v611
    %v613 = vand.u32 %v612, 4294901760
    %614 = vmatpush1.msra.mxu0 %v613
    %615 = vmatprep.subr.mxu0 0.0
    %v616 = vand.u32 %v456, 4294901760
    %v617 = vsub.f32 %v456, %v616
    %v618 = vand.u32 %v617, 4294901760
    %v619 = vsub.f32 %v617, %v618
    %v620 = vand.u32 %v619, 4294901760
    %621 = vmatpush1.msra.mxu0 %v620
    %622 = vmatprep.subr.mxu0 0.0
    %v623 = vand.u32 %v457, 4294901760
    %v624 = vsub.f32 %v457, %v623
    %v625 = vand.u32 %v624, 4294901760
    %v626 = vsub.f32 %v624, %v625
    %v627 = vand.u32 %v626, 4294901760
    %628 = vmatpush1.msra.mxu0 %v627
    %629 = vmatprep.subr.mxu0 0.0
    %v630 = vand.u32 %v458, 4294901760
    %v631 = vsub.f32 %v458, %v630
    %v632 = vand.u32 %v631, 4294901760
    %v633 = vsub.f32 %v631, %v632
    %v634 = vand.u32 %v633, 4294901760
    %635 = vmatpush1.msra.mxu0 %v634
    %636 = vmatprep.subr.mxu0 0.0
    %v637 = vand.u32 %v459, 4294901760
    %v638 = vsub.f32 %v459, %v637
    %v639 = vand.u32 %v638, 4294901760
    %v640 = vsub.f32 %v638, %v639
    %v641 = vand.u32 %v640, 4294901760
    %642 = vmatpush1.msra.mxu0 %v641
    %643 = vmatprep.subr.mxu0 0.0
    %v644 = vand.u32 %v460, 4294901760
    %v645 = vsub.f32 %v460, %v644
    %v646 = vand.u32 %v645, 4294901760
    %v647 = vsub.f32 %v645, %v646
    %v648 = vand.u32 %v647, 4294901760
    %649 = vmatpush1.msra.mxu0 %v648
    %650 = vmatprep.subr.mxu0 0.0
    %v651 = vand.u32 %v461, 4294901760
    %v652 = vsub.f32 %v461, %v651
    %v653 = vand.u32 %v652, 4294901760
    %v654 = vsub.f32 %v652, %v653
    %v655 = vand.u32 %v654, 4294901760
    %656 = vmatpush1.msra.mxu0 %v655
    %657 = vmatprep.subr.mxu0 0.0
    %v658 = vand.u32 %v462, 4294901760
    %v659 = vsub.f32 %v462, %v658
    %v660 = vand.u32 %v659, 4294901760
    %v661 = vsub.f32 %v659, %v660
    %v662 = vand.u32 %v661, 4294901760
    %663 = vmatpush1.msra.mxu0 %v662
    %664 = vmatprep.subr.mxu0 0.0
    %v665 = vand.u32 %v463, 4294901760
    %v666 = vsub.f32 %v463, %v665
    %v667 = vand.u32 %v666, 4294901760
    %v668 = vsub.f32 %v666, %v667
    %v669 = vand.u32 %v668, 4294901760
    %670 = vmatpush1.msra.mxu0 %v669
    %671 = vmatprep.subr.mxu0 0.0
    %v672 = vand.u32 %v464, 4294901760
    %v673 = vsub.f32 %v464, %v672
    %v674 = vand.u32 %v673, 4294901760
    %v675 = vsub.f32 %v673, %v674
    %v676 = vand.u32 %v675, 4294901760
    %677 = vmatpush1.msra.mxu0 %v676
    %678 = vmatprep.subr.mxu0 0.0
    %v679 = vand.u32 %v465, 4294901760
    %v680 = vsub.f32 %v465, %v679
    %v681 = vand.u32 %v680, 4294901760
    %v682 = vsub.f32 %v680, %v681
    %v683 = vand.u32 %v682, 4294901760
    %684 = vmatpush1.msra.mxu0 %v683
    %685 = vmatprep.subr.mxu0 0.0
    %v686 = vand.u32 %v466, 4294901760
    %v687 = vsub.f32 %v466, %v686
    %v688 = vand.u32 %v687, 4294901760
    %v689 = vsub.f32 %v687, %v688
    %v690 = vand.u32 %v689, 4294901760
    %691 = vmatpush1.msra.mxu0 %v690
    %692 = vmatprep.subr.mxu0 0.0
    %v693 = vand.u32 %v467, 4294901760
    %v694 = vsub.f32 %v467, %v693
    %v695 = vand.u32 %v694, 4294901760
    %v696 = vsub.f32 %v694, %v695
    %v697 = vand.u32 %v696, 4294901760
    %698 = vmatpush1.msra.mxu0 %v697
    %699 = vmatprep.subr.mxu0 0.0
    %700 = vmatpush1.msra.mxu0 0.0
    %701 = vmatprep.subr.mxu0 0.0
    %702 = vmatpush1.msra.mxu0 0.0
    %703 = vmatprep.subr.mxu0 0.0
    %704 = vmatpush1.msra.mxu0 0.0
    %705 = vmatprep.subr.mxu0 0.0
    %706 = vmatpush1.msra.mxu0 0.0
    %707 = vmatprep.subr.mxu0 0.0
    %708 = vmatpush1.msra.mxu0 0.0
    %709 = vmatprep.subr.mxu0 0.0
    %710 = vmatpush1.msra.mxu0 0.0
    %711 = vmatprep.subr.mxu0 0.0
    %712 = vmatpush1.msra.mxu0 0.0
    %713 = vmatprep.subr.mxu0 0.0
    %714 = vmatpush1.msra.mxu0 0.0
    %715 = vmatprep.subr.mxu0 0.0
    %716 = vmatpush1.msra.mxu0 0.0
    %717 = vmatprep.subr.mxu0 0.0
    %718 = vmatpush1.msra.mxu0 0.0
    %719 = vmatprep.subr.mxu0 0.0
    %720 = vmatpush1.msra.mxu0 0.0
    %721 = vmatprep.subr.mxu0 0.0
    %722 = vmatpush1.msra.mxu0 0.0
    %723 = vmatprep.subr.mxu0 0.0
    %724 = vmatpush1.msra.mxu0 0.0
    %725 = vmatprep.subr.mxu0 0.0
    %726 = vmatpush1.msra.mxu0 0.0
    %727 = vmatprep.subr.mxu0 0.0
    %728 = vmatpush1.msra.mxu0 0.0
    %729 = vmatprep.subr.mxu0 0.0
    %730 = vmatpush1.msra.mxu0 0.0
    %731 = vmatprep.mubr.f32.mxu0 0.0
    %v732 = vand.u32 %v495, 4294901760
    %733 = vmatmul.mubr.f32.gmra.mrb[0].mxu0 %v732
    %v734 = vpop.f32.mrb[0].mxu0
    %v735 = vadd.f32 %v584, %v734
    %v736 = vpop.f32.mrb[0].mxu0
    %737 = vdwg.mxu0
    %738 = vmatprep.subr.mxu0 0.0
    %v739 = vand.u32 %v452, 4294901760
    %v740 = vsub.f32 %v452, %v739
    %741 = vmatpush1.msra.mxu0 %v740
    %742 = vmatprep.subr.mxu0 0.0
    %v743 = vand.u32 %v453, 4294901760
    %v744 = vsub.f32 %v453, %v743
    %745 = vmatpush1.msra.mxu0 %v744
    %746 = vmatprep.subr.mxu0 0.0
    %v747 = vand.u32 %v454, 4294901760
    %v748 = vsub.f32 %v454, %v747
    %749 = vmatpush1.msra.mxu0 %v748
    %750 = vmatprep.subr.mxu0 0.0
    %v751 = vand.u32 %v455, 4294901760
    %v752 = vsub.f32 %v455, %v751
    %753 = vmatpush1.msra.mxu0 %v752
    %754 = vmatprep.subr.mxu0 0.0
    %v755 = vand.u32 %v456, 4294901760
    %v756 = vsub.f32 %v456, %v755
    %757 = vmatpush1.msra.mxu0 %v756
    %758 = vmatprep.subr.mxu0 0.0
    %v759 = vand.u32 %v457, 4294901760
    %v760 = vsub.f32 %v457, %v759
    %761 = vmatpush1.msra.mxu0 %v760
    %762 = vmatprep.subr.mxu0 0.0
    %v763 = vand.u32 %v458, 4294901760
    %v764 = vsub.f32 %v458, %v763
    %765 = vmatpush1.msra.mxu0 %v764
    %766 = vmatprep.subr.mxu0 0.0
    %v767 = vand.u32 %v459, 4294901760
    %v768 = vsub.f32 %v459, %v767
    %769 = vmatpush1.msra.mxu0 %v768
    %770 = vmatprep.subr.mxu0 0.0
    %v771 = vand.u32 %v460, 4294901760
    %v772 = vsub.f32 %v460, %v771
    %773 = vmatpush1.msra.mxu0 %v772
    %774 = vmatprep.subr.mxu0 0.0
    %v775 = vand.u32 %v461, 4294901760
    %v776 = vsub.f32 %v461, %v775
    %777 = vmatpush1.msra.mxu0 %v776
    %778 = vmatprep.subr.mxu0 0.0
    %v779 = vand.u32 %v462, 4294901760
    %v780 = vsub.f32 %v462, %v779
    %781 = vmatpush1.msra.mxu0 %v780
    %782 = vmatprep.subr.mxu0 0.0
    %v783 = vand.u32 %v463, 4294901760
    %v784 = vsub.f32 %v463, %v783
    %785 = vmatpush1.msra.mxu0 %v784
    %786 = vmatprep.subr.mxu0 0.0
    %v787 = vand.u32 %v464, 4294901760
    %v788 = vsub.f32 %v464, %v787
    %789 = vmatpush1.msra.mxu0 %v788
    %790 = vmatprep.subr.mxu0 0.0
    %v791 = vand.u32 %v465, 4294901760
    %v792 = vsub.f32 %v465, %v791
    %793 = vmatpush1.msra.mxu0 %v792
    %794 = vmatprep.subr.mxu0 0.0
    %v795 = vand.u32 %v466, 4294901760
    %v796 = vsub.f32 %v466, %v795
    %797 = vmatpush1.msra.mxu0 %v796
    %798 = vmatprep.subr.mxu0 0.0
    %v799 = vand.u32 %v467, 4294901760
    %v800 = vsub.f32 %v467, %v799
    %801 = vmatpush1.msra.mxu0 %v800
    %802 = vmatprep.subr.mxu0 0.0
    %803 = vmatpush1.msra.mxu0 0.0
    %804 = vmatprep.subr.mxu0 0.0
    %805 = vmatpush1.msra.mxu0 0.0
    %806 = vmatprep.subr.mxu0 0.0
    %807 = vmatpush1.msra.mxu0 0.0
    %808 = vmatprep.subr.mxu0 0.0
    %809 = vmatpush1.msra.mxu0 0.0
    %810 = vmatprep.subr.mxu0 0.0
    %811 = vmatpush1.msra.mxu0 0.0
    %812 = vmatprep.subr.mxu0 0.0
    %813 = vmatpush1.msra.mxu0 0.0
    %814 = vmatprep.subr.mxu0 0.0
    %815 = vmatpush1.msra.mxu0 0.0
    %816 = vmatprep.subr.mxu0 0.0
    %817 = vmatpush1.msra.mxu0 0.0
    %818 = vmatprep.subr.mxu0 0.0
    %819 = vmatpush1.msra.mxu0 0.0
    %820 = vmatprep.subr.mxu0 0.0
    %821 = vmatpush1.msra.mxu0 0.0
    %822 = vmatprep.subr.mxu0 0.0
    %823 = vmatpush1.msra.mxu0 0.0
    %824 = vmatprep.subr.mxu0 0.0
    %825 = vmatpush1.msra.mxu0 0.0
    %826 = vmatprep.subr.mxu0 0.0
    %827 = vmatpush1.msra.mxu0 0.0
    %828 = vmatprep.subr.mxu0 0.0
    %829 = vmatpush1.msra.mxu0 0.0
    %830 = vmatprep.subr.mxu0 0.0
    %831 = vmatpush1.msra.mxu0 0.0
    %832 = vmatprep.subr.mxu0 0.0
    %833 = vmatpush1.msra.mxu0 0.0
    %834 = vmatprep.mubr.f32.mxu0 0.0
    %v835 = vand.u32 %v495, 4294901760
    %v836 = vsub.f32 %v495, %v835
    %837 = vmatmul.mubr.f32.gmra.mrb[0].mxu0 %v836
    %v838 = vpop.f32.mrb[0].mxu0
    %v839 = vadd.f32 %v735, %v838
    %v840 = vpop.f32.mrb[0].mxu0
    %841 = vdwg.mxu0
    %842 = vmatprep.subr.mxu0 0.0
    %v843 = vand.u32 %v452, 4294901760
    %844 = vmatpush1.msra.mxu0 %v843
    %845 = vmatprep.subr.mxu0 0.0
    %v846 = vand.u32 %v453, 4294901760
    %847 = vmatpush1.msra.mxu0 %v846
    %848 = vmatprep.subr.mxu0 0.0
    %v849 = vand.u32 %v454, 4294901760
    %850 = vmatpush1.msra.mxu0 %v849
    %851 = vmatprep.subr.mxu0 0.0
    %v852 = vand.u32 %v455, 4294901760
    %853 = vmatpush1.msra.mxu0 %v852
    %854 = vmatprep.subr.mxu0 0.0
    %v855 = vand.u32 %v456, 4294901760
    %856 = vmatpush1.msra.mxu0 %v855
    %857 = vmatprep.subr.mxu0 0.0
    %v858 = vand.u32 %v457, 4294901760
    %859 = vmatpush1.msra.mxu0 %v858
    %860 = vmatprep.subr.mxu0 0.0
    %v861 = vand.u32 %v458, 4294901760
    %862 = vmatpush1.msra.mxu0 %v861
    %863 = vmatprep.subr.mxu0 0.0
    %v864 = vand.u32 %v459, 4294901760
    %865 = vmatpush1.msra.mxu0 %v864
    %866 = vmatprep.subr.mxu0 0.0
    %v867 = vand.u32 %v460, 4294901760
    %868 = vmatpush1.msra.mxu0 %v867
    %869 = vmatprep.subr.mxu0 0.0
    %v870 = vand.u32 %v461, 4294901760
    %871 = vmatpush1.msra.mxu0 %v870
    %872 = vmatprep.subr.mxu0 0.0
    %v873 = vand.u32 %v462, 4294901760
    %874 = vmatpush1.msra.mxu0 %v873
    %875 = vmatprep.subr.mxu0 0.0
    %v876 = vand.u32 %v463, 4294901760
    %877 = vmatpush1.msra.mxu0 %v876
    %878 = vmatprep.subr.mxu0 0.0
    %v879 = vand.u32 %v464, 4294901760
    %880 = vmatpush1.msra.mxu0 %v879
    %881 = vmatprep.subr.mxu0 0.0
    %v882 = vand.u32 %v465, 4294901760
    %883 = vmatpush1.msra.mxu0 %v882
    %884 = vmatprep.subr.mxu0 0.0
    %v885 = vand.u32 %v466, 4294901760
    %886 = vmatpush1.msra.mxu0 %v885
    %887 = vmatprep.subr.mxu0 0.0
    %v888 = vand.u32 %v467, 4294901760
    %889 = vmatpush1.msra.mxu0 %v888
    %890 = vmatprep.subr.mxu0 0.0
    %891 = vmatpush1.msra.mxu0 0.0
    %892 = vmatprep.subr.mxu0 0.0
    %893 = vmatpush1.msra.mxu0 0.0
    %894 = vmatprep.subr.mxu0 0.0
    %895 = vmatpush1.msra.mxu0 0.0
    %896 = vmatprep.subr.mxu0 0.0
    %897 = vmatpush1.msra.mxu0 0.0
    %898 = vmatprep.subr.mxu0 0.0
    %899 = vmatpush1.msra.mxu0 0.0
    %900 = vmatprep.subr.mxu0 0.0
    %901 = vmatpush1.msra.mxu0 0.0
    %902 = vmatprep.subr.mxu0 0.0
    %903 = vmatpush1.msra.mxu0 0.0
    %904 = vmatprep.subr.mxu0 0.0
    %905 = vmatpush1.msra.mxu0 0.0
    %906 = vmatprep.subr.mxu0 0.0
    %907 = vmatpush1.msra.mxu0 0.0
    %908 = vmatprep.subr.mxu0 0.0
    %909 = vmatpush1.msra.mxu0 0.0
    %910 = vmatprep.subr.mxu0 0.0
    %911 = vmatpush1.msra.mxu0 0.0
    %912 = vmatprep.subr.mxu0 0.0
    %913 = vmatpush1.msra.mxu0 0.0
    %914 = vmatprep.subr.mxu0 0.0
    %915 = vmatpush1.msra.mxu0 0.0
    %916 = vmatprep.subr.mxu0 0.0
    %917 = vmatpush1.msra.mxu0 0.0
    %918 = vmatprep.subr.mxu0 0.0
    %919 = vmatpush1.msra.mxu0 0.0
    %920 = vmatprep.subr.mxu0 0.0
    %921 = vmatpush1.msra.mxu0 0.0
    %922 = vmatprep.mubr.f32.mxu0 0.0
    %v923 = vand.u32 %v495, 4294901760
    %v924 = vsub.f32 %v495, %v923
    %v925 = vand.u32 %v924, 4294901760
    %926 = vmatmul.mubr.f32.gmra.mrb[0].mxu0 %v925
    %v927 = vpop.f32.mrb[0].mxu0
    %v928 = vadd.f32 %v839, %v927
    %v929 = vpop.f32.mrb[0].mxu0
    %930 = vdwg.mxu0
    %931 = vmatprep.subr.mxu0 0.0
    %v932 = vand.u32 %v452, 4294901760
    %v933 = vsub.f32 %v452, %v932
    %v934 = vand.u32 %v933, 4294901760
    %935 = vmatpush1.msra.mxu0 %v934
    %936 = vmatprep.subr.mxu0 0.0
    %v937 = vand.u32 %v453, 4294901760
    %v938 = vsub.f32 %v453, %v937
    %v939 = vand.u32 %v938, 4294901760
    %940 = vmatpush1.msra.mxu0 %v939
    %941 = vmatprep.subr.mxu0 0.0
    %v942 = vand.u32 %v454, 4294901760
    %v943 = vsub.f32 %v454, %v942
    %v944 = vand.u32 %v943, 4294901760
    %945 = vmatpush1.msra.mxu0 %v944
    %946 = vmatprep.subr.mxu0 0.0
    %v947 = vand.u32 %v455, 4294901760
    %v948 = vsub.f32 %v455, %v947
    %v949 = vand.u32 %v948, 4294901760
    %950 = vmatpush1.msra.mxu0 %v949
    %951 = vmatprep.subr.mxu0 0.0
    %v952 = vand.u32 %v456, 4294901760
    %v953 = vsub.f32 %v456, %v952
    %v954 = vand.u32 %v953, 4294901760
    %955 = vmatpush1.msra.mxu0 %v954
    %956 = vmatprep.subr.mxu0 0.0
    %v957 = vand.u32 %v457, 4294901760
    %v958 = vsub.f32 %v457, %v957
    %v959 = vand.u32 %v958, 4294901760
    %960 = vmatpush1.msra.mxu0 %v959
    %961 = vmatprep.subr.mxu0 0.0
    %v962 = vand.u32 %v458, 4294901760
    %v963 = vsub.f32 %v458, %v962
    %v964 = vand.u32 %v963, 4294901760
    %965 = vmatpush1.msra.mxu0 %v964
    %966 = vmatprep.subr.mxu0 0.0
    %v967 = vand.u32 %v459, 4294901760
    %v968 = vsub.f32 %v459, %v967
    %v969 = vand.u32 %v968, 4294901760
    %970 = vmatpush1.msra.mxu0 %v969
    %971 = vmatprep.subr.mxu0 0.0
    %v972 = vand.u32 %v460, 4294901760
    %v973 = vsub.f32 %v460, %v972
    %v974 = vand.u32 %v973, 4294901760
    %975 = vmatpush1.msra.mxu0 %v974
    %976 = vmatprep.subr.mxu0 0.0
    %v977 = vand.u32 %v461, 4294901760
    %v978 = vsub.f32 %v461, %v977
    %v979 = vand.u32 %v978, 4294901760
    %980 = vmatpush1.msra.mxu0 %v979
    %981 = vmatprep.subr.mxu0 0.0
    %v982 = vand.u32 %v462, 4294901760
    %v983 = vsub.f32 %v462, %v982
    %v984 = vand.u32 %v983, 4294901760
    %985 = vmatpush1.msra.mxu0 %v984
    %986 = vmatprep.subr.mxu0 0.0
    %v987 = vand.u32 %v463, 4294901760
    %v988 = vsub.f32 %v463, %v987
    %v989 = vand.u32 %v988, 4294901760
    %990 = vmatpush1.msra.mxu0 %v989
    %991 = vmatprep.subr.mxu0 0.0
    %v992 = vand.u32 %v464, 4294901760
    %v993 = vsub.f32 %v464, %v992
    %v994 = vand.u32 %v993, 4294901760
    %995 = vmatpush1.msra.mxu0 %v994
    %996 = vmatprep.subr.mxu0 0.0
    %v997 = vand.u32 %v465, 4294901760
    %v998 = vsub.f32 %v465, %v997
    %v999 = vand.u32 %v998, 4294901760
    %1000 = vmatpush1.msra.mxu0 %v999
    %1001 = vmatprep.subr.mxu0 0.0
    %v1002 = vand.u32 %v466, 4294901760
    %v1003 = vsub.f32 %v466, %v1002
    %v1004 = vand.u32 %v1003, 4294901760
    %1005 = vmatpush1.msra.mxu0 %v1004
    %1006 = vmatprep.subr.mxu0 0.0
    %v1007 = vand.u32 %v467, 4294901760
    %v1008 = vsub.f32 %v467, %v1007
    %v1009 = vand.u32 %v1008, 4294901760
    %1010 = vmatpush1.msra.mxu0 %v1009
    %1011 = vmatprep.subr.mxu0 0.0
    %1012 = vmatpush1.msra.mxu0 0.0
    %1013 = vmatprep.subr.mxu0 0.0
    %1014 = vmatpush1.msra.mxu0 0.0
    %1015 = vmatprep.subr.mxu0 0.0
    %1016 = vmatpush1.msra.mxu0 0.0
    %1017 = vmatprep.subr.mxu0 0.0
    %1018 = vmatpush1.msra.mxu0 0.0
    %1019 = vmatprep.subr.mxu0 0.0
    %1020 = vmatpush1.msra.mxu0 0.0
    %1021 = vmatprep.subr.mxu0 0.0
    %1022 = vmatpush1.msra.mxu0 0.0
    %1023 = vmatprep.subr.mxu0 0.0
    %1024 = vmatpush1.msra.mxu0 0.0
    %1025 = vmatprep.subr.mxu0 0.0
    %1026 = vmatpush1.msra.mxu0 0.0
    %1027 = vmatprep.subr.mxu0 0.0
    %1028 = vmatpush1.msra.mxu0 0.0
    %1029 = vmatprep.subr.mxu0 0.0
    %1030 = vmatpush1.msra.mxu0 0.0
    %1031 = vmatprep.subr.mxu0 0.0
    %1032 = vmatpush1.msra.mxu0 0.0
    %1033 = vmatprep.subr.mxu0 0.0
    %1034 = vmatpush1.msra.mxu0 0.0
    %1035 = vmatprep.subr.mxu0 0.0
    %1036 = vmatpush1.msra.mxu0 0.0
    %1037 = vmatprep.subr.mxu0 0.0
    %1038 = vmatpush1.msra.mxu0 0.0
    %1039 = vmatprep.subr.mxu0 0.0
    %1040 = vmatpush1.msra.mxu0 0.0
    %1041 = vmatprep.subr.mxu0 0.0
    %1042 = vmatpush1.msra.mxu0 0.0
    %1043 = vmatprep.mubr.f32.mxu0 0.0
    %v1044 = vand.u32 %v495, 4294901760
    %1045 = vmatmul.mubr.f32.gmra.mrb[0].mxu0 %v1044
    %v1046 = vpop.f32.mrb[0].mxu0
    %v1047 = vadd.f32 %v928, %v1046
    %v1048 = vpop.f32.mrb[0].mxu0
    %1049 = vdwg.mxu0
    %1050 = vmatprep.subr.mxu0 0.0
    %v1051 = vand.u32 %v452, 4294901760
    %1052 = vmatpush1.msra.mxu0 %v1051
    %1053 = vmatprep.subr.mxu0 0.0
    %v1054 = vand.u32 %v453, 4294901760
    %1055 = vmatpush1.msra.mxu0 %v1054
    %1056 = vmatprep.subr.mxu0 0.0
    %v1057 = vand.u32 %v454, 4294901760
    %1058 = vmatpush1.msra.mxu0 %v1057
    %1059 = vmatprep.subr.mxu0 0.0
    %v1060 = vand.u32 %v455, 4294901760
    %1061 = vmatpush1.msra.mxu0 %v1060
    %1062 = vmatprep.subr.mxu0 0.0
    %v1063 = vand.u32 %v456, 4294901760
    %1064 = vmatpush1.msra.mxu0 %v1063
    %1065 = vmatprep.subr.mxu0 0.0
    %v1066 = vand.u32 %v457, 4294901760
    %1067 = vmatpush1.msra.mxu0 %v1066
    %1068 = vmatprep.subr.mxu0 0.0
    %v1069 = vand.u32 %v458, 4294901760
    %1070 = vmatpush1.msra.mxu0 %v1069
    %1071 = vmatprep.subr.mxu0 0.0
    %v1072 = vand.u32 %v459, 4294901760
    %1073 = vmatpush1.msra.mxu0 %v1072
    %1074 = vmatprep.subr.mxu0 0.0
    %v1075 = vand.u32 %v460, 4294901760
    %1076 = vmatpush1.msra.mxu0 %v1075
    %1077 = vmatprep.subr.mxu0 0.0
    %v1078 = vand.u32 %v461, 4294901760
    %1079 = vmatpush1.msra.mxu0 %v1078
    %1080 = vmatprep.subr.mxu0 0.0
    %v1081 = vand.u32 %v462, 4294901760
    %1082 = vmatpush1.msra.mxu0 %v1081
    %1083 = vmatprep.subr.mxu0 0.0
    %v1084 = vand.u32 %v463, 4294901760
    %1085 = vmatpush1.msra.mxu0 %v1084
    %1086 = vmatprep.subr.mxu0 0.0
    %v1087 = vand.u32 %v464, 4294901760
    %1088 = vmatpush1.msra.mxu0 %v1087
    %1089 = vmatprep.subr.mxu0 0.0
    %v1090 = vand.u32 %v465, 4294901760
    %1091 = vmatpush1.msra.mxu0 %v1090
    %1092 = vmatprep.subr.mxu0 0.0
    %v1093 = vand.u32 %v466, 4294901760
    %1094 = vmatpush1.msra.mxu0 %v1093
    %1095 = vmatprep.subr.mxu0 0.0
    %v1096 = vand.u32 %v467, 4294901760
    %1097 = vmatpush1.msra.mxu0 %v1096
    %1098 = vmatprep.subr.mxu0 0.0
    %1099 = vmatpush1.msra.mxu0 0.0
    %1100 = vmatprep.subr.mxu0 0.0
    %1101 = vmatpush1.msra.mxu0 0.0
    %1102 = vmatprep.subr.mxu0 0.0
    %1103 = vmatpush1.msra.mxu0 0.0
    %1104 = vmatprep.subr.mxu0 0.0
    %1105 = vmatpush1.msra.mxu0 0.0
    %1106 = vmatprep.subr.mxu0 0.0
    %1107 = vmatpush1.msra.mxu0 0.0
    %1108 = vmatprep.subr.mxu0 0.0
    %1109 = vmatpush1.msra.mxu0 0.0
    %1110 = vmatprep.subr.mxu0 0.0
    %1111 = vmatpush1.msra.mxu0 0.0
    %1112 = vmatprep.subr.mxu0 0.0
    %1113 = vmatpush1.msra.mxu0 0.0
    %1114 = vmatprep.subr.mxu0 0.0
    %1115 = vmatpush1.msra.mxu0 0.0
    %1116 = vmatprep.subr.mxu0 0.0
    %1117 = vmatpush1.msra.mxu0 0.0
    %1118 = vmatprep.subr.mxu0 0.0
    %1119 = vmatpush1.msra.mxu0 0.0
    %1120 = vmatprep.subr.mxu0 0.0
    %1121 = vmatpush1.msra.mxu0 0.0
    %1122 = vmatprep.subr.mxu0 0.0
    %1123 = vmatpush1.msra.mxu0 0.0
    %1124 = vmatprep.subr.mxu0 0.0
    %1125 = vmatpush1.msra.mxu0 0.0
    %1126 = vmatprep.subr.mxu0 0.0
    %1127 = vmatpush1.msra.mxu0 0.0
    %1128 = vmatprep.subr.mxu0 0.0
    %1129 = vmatpush1.msra.mxu0 0.0
    %1130 = vmatprep.mubr.f32.mxu0 0.0
    %v1131 = vand.u32 %v495, 4294901760
    %1132 = vmatmul.mubr.f32.gmra.mrb[0].mxu0 %v1131
    %v1133 = vpop.f32.mrb[0].mxu0
    %v1134 = vadd.f32 %v1047, %v1133
    %v1135 = vpop.f32.mrb[0].mxu0
    %1136 = vdwg.mxu0
    %v1137 = vmul.f32 %v1134, %v1134
    %v1139 = vrot.slane %v1137, 7
    %v1141 = vsub.f32 %v1134, %v1139
    %v1142 = vmax.f32 %v1141, 0.0
    %v1143 = vadd.f32 %v1142, 1e-05
    %v1144 = vrsqrt.pop %v1143
    %v1147 = vunpack.c.l.s4 1966171168
    %v1148 = vunpack.c.0.s8 %v1147
    %v1149 = vlaneseq
    %v1150 = vshrl.u32 %v1149, 7
    %v1151 = vsub.s32 %v1148, %v1150
    %v1152 = vrot.slane %v1144, %v1151
    %v1153 = vcombine.high %v1152, %v1152
    %v1155 = vunpack.c.l.s4 1966171168
    %v1156 = vunpack.c.0.s8 %v1155
    %v1157 = vlaneseq
    %v1158 = vshrl.u32 %v1157, 7
    %v1159 = vsub.s32 %v1156, %v1158
    %v1160 = vrot.slane %v1153, %v1159
    %v1162 = vmul.f32 %v450, %v1160
    %v1163 = vmul.f32 %v1134, %v1162
    %v1164 = vsub.f32 %v451, %v1163
    %v1166 = vlaneseq
    %v1167 = vshrl.u32 %v1166, 7
    %v1168 = vsub.s32 0, %v1167
    %v1169 = vrot.slane %v1162, %v1168
    %v1171 = vmul.f32 %v468, %v1169
    %v1172 = vmul.f32 %v469, %v1169
    %v1173 = vmul.f32 %v470, %v1169
    %v1174 = vmul.f32 %v471, %v1169
    %v1176 = vlaneseq
    %v1177 = vshrl.u32 %v1176, 7
    %v1178 = vsub.s32 0, %v1177
    %v1179 = vrot.slane %v1164, %v1178
    %v1181 = vadd.f32 %v1171, %v1179
    %v1182 = vadd.f32 %v1172, %v1179
    %v1183 = vadd.f32 %v1173, %v1179
    %v1184 = vadd.f32 %v1174, %v1179
    %1185 = vst [vmem:[#allocation3] sm:$0x3] 0.0
    %1186 = vst [vmem:[#allocation3 + $0x22] sm:$0x3] 0.0
    %1187 = vst [vmem:[#allocation3 + $0x2] sm:$0xff] %v1181
    %1188 = vst [vmem:[#allocation3 + $0xa] sm:$0xff] %v1182
    %1189 = vst [vmem:[#allocation3 + $0x12] sm:$0xff] %v1183
    %1190 = vst [vmem:[#allocation3 + $0x1a] sm:$0xff] %v1184
    %v1191 = vld [vmem:[#allocation3] sm:$0xff]
    %v1192 = vld [vmem:[#allocation3 + $0x8] sm:$0xff]
    %v1193 = vld [vmem:[#allocation3 + $0x10] sm:$0xff]
    %v1194 = vld [vmem:[#allocation3 + $0x18] sm:$0xff]
    %v1195 = vld [vmem:[#allocation9] sm:$0xff]
    %v1196 = vld [vmem:[#allocation9 + $0x8] sm:$0xff]
    %v1197 = vld [vmem:[#allocation9 + $0x10] sm:$0xff]
    %v1198 = vld [vmem:[#allocation9 + $0x18] sm:$0xff]
    %v1199 = vld [vmem:[#allocation9 + $0x20] sm:$0xff]
    %v1200 = vld [vmem:[#allocation9 + $0x28] sm:$0xff]
    %v1201 = vld [vmem:[#allocation9 + $0x30] sm:$0xff]
    %v1202 = vld [vmem:[#allocation9 + $0x38] sm:$0xff]
    %v1203 = vld [vmem:[#allocation9 + $0x40] sm:$0xff]
    %v1204 = vld [vmem:[#allocation9 + $0x48] sm:$0xff]
    %v1205 = vld [vmem:[#allocation9 + $0x50] sm:$0xff]
    %v1206 = vld [vmem:[#allocation9 + $0x58] sm:$0xff]
    %v1207 = vld [vmem:[#allocation9 + $0x60] sm:$0xff]
    %v1208 = vld [vmem:[#allocation9 + $0x68] sm:$0xff]
    %v1209 = vld [vmem:[#allocation9 + $0x70] sm:$0xff]
    %v1210 = vld [vmem:[#allocation9 + $0x78] sm:$0xff]
    %v1211 = vld [vmem:[#allocation3 + $0x2] sm:$0xff]
    %v1212 = vld [vmem:[#allocation3 + $0xa] sm:$0xff]
    %v1213 = vld [vmem:[#allocation3 + $0x12] sm:$0xff]
    %v1214 = vld [vmem:[#allocation3 + $0x1a] sm:$0xff]
    %s1215 = scalar_lea.vmem [#allocation9], 128
    %v1216 = vld [vmem:[%s1215] sm:$0xff]
    %v1217 = vld [vmem:[%s1215 + $0x8] sm:$0xff]
    %v1218 = vld [vmem:[%s1215 + $0x10] sm:$0xff]
    %v1219 = vld [vmem:[%s1215 + $0x18] sm:$0xff]
    %v1220 = vld [vmem:[%s1215 + $0x20] sm:$0xff]
    %v1221 = vld [vmem:[%s1215 + $0x28] sm:$0xff]
    %v1222 = vld [vmem:[%s1215 + $0x30] sm:$0xff]
    %v1223 = vld [vmem:[%s1215 + $0x38] sm:$0xff]
    %v1224 = vld [vmem:[%s1215 + $0x40] sm:$0xff]
    %v1225 = vld [vmem:[%s1215 + $0x48] sm:$0xff]
    %v1226 = vld [vmem:[%s1215 + $0x50] sm:$0xff]
    %v1227 = vld [vmem:[%s1215 + $0x58] sm:$0xff]
    %v1228 = vld [vmem:[%s1215 + $0x60] sm:$0xff]
    %v1229 = vld [vmem:[%s1215 + $0x68] sm:$0xff]
    %v1230 = vld [vmem:[%s1215 + $0x70] sm:$0xff]
    %v1231 = vld [vmem:[%s1215 + $0x78] sm:$0xff]
    %1232 = vmatprep.subr.mxu0 0.0
    %1233 = vmatpush1.msra.mxu0 %v1216
    %1234 = vmatprep.subr.mxu0 0.0
    %1235 = vmatpush1.msra.mxu0 %v1217
    %1236 = vmatprep.subr.mxu0 0.0
    %1237 = vmatpush1.msra.mxu0 %v1218
    %1238 = vmatprep.subr.mxu0 0.0
    %1239 = vmatpush1.msra.mxu0 %v1219
    %1240 = vmatprep.subr.mxu0 0.0
    %1241 = vmatpush1.msra.mxu0 %v1220
    %1242 = vmatprep.subr.mxu0 0.0
    %1243 = vmatpush1.msra.mxu0 %v1221
    %1244 = vmatprep.subr.mxu0 0.0
    %1245 = vmatpush1.msra.mxu0 %v1222
    %1246 = vmatprep.subr.mxu0 0.0
    %1247 = vmatpush1.msra.mxu0 %v1223
    %1248 = vmatprep.subr.mxu0 0.0
    %1249 = vmatpush1.msra.mxu0 %v1224
    %1250 = vmatprep.subr.mxu0 0.0
    %1251 = vmatpush1.msra.mxu0 %v1225
    %1252 = vmatprep.subr.mxu0 0.0
    %1253 = vmatpush1.msra.mxu0 %v1226
    %1254 = vmatprep.subr.mxu0 0.0
    %1255 = vmatpush1.msra.mxu0 %v1227
    %1256 = vmatprep.subr.mxu0 0.0
    %1257 = vmatpush1.msra.mxu0 %v1228
    %1258 = vmatprep.subr.mxu0 0.0
    %1259 = vmatpush1.msra.mxu0 %v1229
    %1260 = vmatprep.subr.mxu0 0.0
    %1261 = vmatpush1.msra.mxu0 %v1230
    %1262 = vmatprep.subr.mxu0 0.0
    %1263 = vmatpush1.msra.mxu0 %v1231
    %1264 = vmatprep.subr.mxu0 0.0
    %1265 = vmatpush1.msra.mxu0 0.0
    %1266 = vmatprep.subr.mxu0 0.0
    %1267 = vmatpush1.msra.mxu0 0.0
    %1268 = vmatprep.subr.mxu0 0.0
    %1269 = vmatpush1.msra.mxu0 0.0
    %1270 = vmatprep.subr.mxu0 0.0
    %1271 = vmatpush1.msra.mxu0 0.0
    %1272 = vmatprep.subr.mxu0 0.0
    %1273 = vmatpush1.msra.mxu0 0.0
    %1274 = vmatprep.subr.mxu0 0.0
    %1275 = vmatpush1.msra.mxu0 0.0
    %1276 = vmatprep.subr.mxu0 0.0
    %1277 = vmatpush1.msra.mxu0 0.0
    %1278 = vmatprep.subr.mxu0 0.0
    %1279 = vmatpush1.msra.mxu0 0.0
    %1280 = vmatprep.subr.mxu0 0.0
    %1281 = vmatpush1.msra.mxu0 0.0
    %1282 = vmatprep.subr.mxu0 0.0
    %1283 = vmatpush1.msra.mxu0 0.0
    %1284 = vmatprep.subr.mxu0 0.0
    %1285 = vmatpush1.msra.mxu0 0.0
    %1286 = vmatprep.subr.mxu0 0.0
    %1287 = vmatpush1.msra.mxu0 0.0
    %1288 = vmatprep.subr.mxu0 0.0
    %1289 = vmatpush1.msra.mxu0 0.0
    %1290 = vmatprep.subr.mxu0 0.0
    %1291 = vmatpush1.msra.mxu0 0.0
    %1292 = vmatprep.subr.mxu0 0.0
    %1293 = vmatpush1.msra.mxu0 0.0
    %1294 = vmatprep.subr.mxu0 0.0
    %1295 = vmatpush1.msra.mxu0 0.0
    %1296 = vmatprep.mubr.f32.mxu0 0.0
    %1297 = vmatmul.mubr.f32.gmra.mrb[0].mxu0 %v1211
    %v1298 = vpop.f32.mrb[0].mxu0
    %v1299 = vadd.f32 0.0, %v1298
    %v1300 = vpop.f32.mrb[0].mxu0
    %1301 = vmatprep.mubr.f32.mxu0 0.0
    %1302 = vmatmul.mubr.f32.gmra.mrb[0].mxu0 %v1212
    %v1303 = vpop.f32.mrb[0].mxu0
    %v1304 = vadd.f32 0.0, %v1303
    %v1305 = vpop.f32.mrb[0].mxu0
    %1306 = vmatprep.mubr.f32.mxu0 0.0
    %1307 = vmatmul.mubr.f32.gmra.mrb[0].mxu0 %v1213
    %v1308 = vpop.f32.mrb[0].mxu0
    %v1309 = vadd.f32 0.0, %v1308
    %v1310 = vpop.f32.mrb[0].mxu0
    %1311 = vmatprep.mubr.f32.mxu0 0.0
    %1312 = vmatmul.mubr.f32.gmra.mrb[0].mxu0 %v1214
    %v1313 = vpop.f32.mrb[0].mxu0
    %v1314 = vadd.f32 0.0, %v1313
    %v1315 = vpop.f32.mrb[0].mxu0
    %1316 = vdwg.mxu0
    %1317 = vmatprep.subr.mxu0 0.0
    %1318 = vmatpush1.msra.mxu0 %v1195
    %1319 = vmatprep.subr.mxu0 0.0
    %1320 = vmatpush1.msra.mxu0 %v1196
    %1321 = vmatprep.subr.mxu0 0.0
    %1322 = vmatpush1.msra.mxu0 %v1197
    %1323 = vmatprep.subr.mxu0 0.0
    %1324 = vmatpush1.msra.mxu0 %v1198
    %1325 = vmatprep.subr.mxu0 0.0
    %1326 = vmatpush1.msra.mxu0 %v1199
    %1327 = vmatprep.subr.mxu0 0.0
    %1328 = vmatpush1.msra.mxu0 %v1200
    %1329 = vmatprep.subr.mxu0 0.0
    %1330 = vmatpush1.msra.mxu0 %v1201
    %1331 = vmatprep.subr.mxu0 0.0
    %1332 = vmatpush1.msra.mxu0 %v1202
    %1333 = vmatprep.subr.mxu0 0.0
    %1334 = vmatpush1.msra.mxu0 %v1203
    %1335 = vmatprep.subr.mxu0 0.0
    %1336 = vmatpush1.msra.mxu0 %v1204
    %1337 = vmatprep.subr.mxu0 0.0
    %1338 = vmatpush1.msra.mxu0 %v1205
    %1339 = vmatprep.subr.mxu0 0.0
    %1340 = vmatpush1.msra.mxu0 %v1206
    %1341 = vmatprep.subr.mxu0 0.0
    %1342 = vmatpush1.msra.mxu0 %v1207
    %1343 = vmatprep.subr.mxu0 0.0
    %1344 = vmatpush1.msra.mxu0 %v1208
    %1345 = vmatprep.subr.mxu0 0.0
    %1346 = vmatpush1.msra.mxu0 %v1209
    %1347 = vmatprep.subr.mxu0 0.0
    %1348 = vmatpush1.msra.mxu0 %v1210
    %1349 = vmatprep.subr.mxu0 0.0
    %1350 = vmatpush1.msra.mxu0 0.0
    %1351 = vmatprep.subr.mxu0 0.0
    %1352 = vmatpush1.msra.mxu0 0.0
    %1353 = vmatprep.subr.mxu0 0.0
    %1354 = vmatpush1.msra.mxu0 0.0
    %1355 = vmatprep.subr.mxu0 0.0
    %1356 = vmatpush1.msra.mxu0 0.0
    %1357 = vmatprep.subr.mxu0 0.0
    %1358 = vmatpush1.msra.mxu0 0.0
    %1359 = vmatprep.subr.mxu0 0.0
    %1360 = vmatpush1.msra.mxu0 0.0
    %1361 = vmatprep.subr.mxu0 0.0
    %1362 = vmatpush1.msra.mxu0 0.0
    %1363 = vmatprep.subr.mxu0 0.0
    %1364 = vmatpush1.msra.mxu0 0.0
    %1365 = vmatprep.subr.mxu0 0.0
    %1366 = vmatpush1.msra.mxu0 0.0
    %1367 = vmatprep.subr.mxu0 0.0
    %1368 = vmatpush1.msra.mxu0 0.0
    %1369 = vmatprep.subr.mxu0 0.0
    %1370 = vmatpush1.msra.mxu0 0.0
    %1371 = vmatprep.subr.mxu0 0.0
    %1372 = vmatpush1.msra.mxu0 0.0
    %1373 = vmatprep.subr.mxu0 0.0
    %1374 = vmatpush1.msra.mxu0 0.0
    %1375 = vmatprep.subr.mxu0 0.0
    %1376 = vmatpush1.msra.mxu0 0.0
    %1377 = vmatprep.subr.mxu0 0.0
    %1378 = vmatpush1.msra.mxu0 0.0
    %1379 = vmatprep.subr.mxu0 0.0
    %1380 = vmatpush1.msra.mxu0 0.0
    %1381 = vmatprep.mubr.f32.mxu0 0.0
    %1382 = vmatmul.mubr.f32.gmra.mrb[0].mxu0 %v1191
    %v1383 = vpop.f32.mrb[0].mxu0
    %v1384 = vadd.f32 %v1299, %v1383
    %v1385 = vpop.f32.mrb[0].mxu0
    %1386 = vmatprep.mubr.f32.mxu0 0.0
    %1387 = vmatmul.mubr.f32.gmra.mrb[0].mxu0 %v1192
    %v1388 = vpop.f32.mrb[0].mxu0
    %v1389 = vadd.f32 %v1304, %v1388
    %v1390 = vpop.f32.mrb[0].mxu0
    %1391 = vmatprep.mubr.f32.mxu0 0.0
    %1392 = vmatmul.mubr.f32.gmra.mrb[0].mxu0 %v1193
    %v1393 = vpop.f32.mrb[0].mxu0
    %v1394 = vadd.f32 %v1309, %v1393
    %v1395 = vpop.f32.mrb[0].mxu0
    %1396 = vmatprep.mubr.f32.mxu0 0.0
    %1397 = vmatmul.mubr.f32.gmra.mrb[0].mxu0 %v1194
    %v1398 = vpop.f32.mrb[0].mxu0
    %v1399 = vadd.f32 %v1314, %v1398
    %v1400 = vpop.f32.mrb[0].mxu0
    %1401 = vdwg.mxu0
    %v1402 = vld [vmem:[#allocation3 + $0x4] sm:$0xff]
    %v1403 = vld [vmem:[#allocation3 + $0xc] sm:$0xff]
    %v1404 = vld [vmem:[#allocation3 + $0x14] sm:$0xff]
    %v1405 = vld [vmem:[#allocation3 + $0x1c] sm:$0xff]
    %s1406 = scalar_lea.vmem [#allocation9], 256
    %v1407 = vld [vmem:[%s1406] sm:$0xff]
    %v1408 = vld [vmem:[%s1406 + $0x8] sm:$0xff]
    %v1409 = vld [vmem:[%s1406 + $0x10] sm:$0xff]
    %v1410 = vld [vmem:[%s1406 + $0x18] sm:$0xff]
    %v1411 = vld [vmem:[%s1406 + $0x20] sm:$0xff]
    %v1412 = vld [vmem:[%s1406 + $0x28] sm:$0xff]
    %v1413 = vld [vmem:[%s1406 + $0x30] sm:$0xff]
    %v1414 = vld [vmem:[%s1406 + $0x38] sm:$0xff]
    %v1415 = vld [vmem:[%s1406 + $0x40] sm:$0xff]
    %v1416 = vld [vmem:[%s1406 + $0x48] sm:$0xff]
    %v1417 = vld [vmem:[%s1406 + $0x50] sm:$0xff]
    %v1418 = vld [vmem:[%s1406 + $0x58] sm:$0xff]
    %v1419 = vld [vmem:[%s1406 + $0x60] sm:$0xff]
    %v1420 = vld [vmem:[%s1406 + $0x68] sm:$0xff]
    %v1421 = vld [vmem:[%s1406 + $0x70] sm:$0xff]
    %v1422 = vld [vmem:[%s1406 + $0x78] sm:$0xff]
    %1423 = vmatprep.subr.mxu0 0.0
    %1424 = vmatpush1.msra.mxu0 %v1407
    %1425 = vmatprep.subr.mxu0 0.0
    %1426 = vmatpush1.msra.mxu0 %v1408
    %1427 = vmatprep.subr.mxu0 0.0
    %1428 = vmatpush1.msra.mxu0 %v1409
    %1429 = vmatprep.subr.mxu0 0.0
    %1430 = vmatpush1.msra.mxu0 %v1410
    %1431 = vmatprep.subr.mxu0 0.0
    %1432 = vmatpush1.msra.mxu0 %v1411
    %1433 = vmatprep.subr.mxu0 0.0
    %1434 = vmatpush1.msra.mxu0 %v1412
    %1435 = vmatprep.subr.mxu0 0.0
    %1436 = vmatpush1.msra.mxu0 %v1413
    %1437 = vmatprep.subr.mxu0 0.0
    %1438 = vmatpush1.msra.mxu0 %v1414
    %1439 = vmatprep.subr.mxu0 0.0
    %1440 = vmatpush1.msra.mxu0 %v1415
    %1441 = vmatprep.subr.mxu0 0.0
    %1442 = vmatpush1.msra.mxu0 %v1416
    %1443 = vmatprep.subr.mxu0 0.0
    %1444 = vmatpush1.msra.mxu0 %v1417
    %1445 = vmatprep.subr.mxu0 0.0
    %1446 = vmatpush1.msra.mxu0 %v1418
    %1447 = vmatprep.subr.mxu0 0.0
    %1448 = vmatpush1.msra.mxu0 %v1419
    %1449 = vmatprep.subr.mxu0 0.0
    %1450 = vmatpush1.msra.mxu0 %v1420
    %1451 = vmatprep.subr.mxu0 0.0
    %1452 = vmatpush1.msra.mxu0 %v1421
    %1453 = vmatprep.subr.mxu0 0.0
    %1454 = vmatpush1.msra.mxu0 %v1422
    %1455 = vmatprep.subr.mxu0 0.0
    %1456 = vmatpush1.msra.mxu0 0.0
    %1457 = vmatprep.subr.mxu0 0.0
    %1458 = vmatpush1.msra.mxu0 0.0
    %1459 = vmatprep.subr.mxu0 0.0
    %1460 = vmatpush1.msra.mxu0 0.0
    %1461 = vmatprep.subr.mxu0 0.0
    %1462 = vmatpush1.msra.mxu0 0.0
    %1463 = vmatprep.subr.mxu0 0.0
    %1464 = vmatpush1.msra.mxu0 0.0
    %1465 = vmatprep.subr.mxu0 0.0
    %1466 = vmatpush1.msra.mxu0 0.0
    %1467 = vmatprep.subr.mxu0 0.0
    %1468 = vmatpush1.msra.mxu0 0.0
    %1469 = vmatprep.subr.mxu0 0.0
    %1470 = vmatpush1.msra.mxu0 0.0
    %1471 = vmatprep.subr.mxu0 0.0
    %1472 = vmatpush1.msra.mxu0 0.0
    %1473 = vmatprep.subr.mxu0 0.0
    %1474 = vmatpush1.msra.mxu0 0.0
    %1475 = vmatprep.subr.mxu0 0.0
    %1476 = vmatpush1.msra.mxu0 0.0
    %1477 = vmatprep.subr.mxu0 0.0
    %1478 = vmatpush1.msra.mxu0 0.0
    %1479 = vmatprep.subr.mxu0 0.0
    %1480 = vmatpush1.msra.mxu0 0.0
    %1481 = vmatprep.subr.mxu0 0.0
    %1482 = vmatpush1.msra.mxu0 0.0
    %1483 = vmatprep.subr.mxu0 0.0
    %1484 = vmatpush1.msra.mxu0 0.0
    %1485 = vmatprep.subr.mxu0 0.0
    %1486 = vmatpush1.msra.mxu0 0.0
    %1487 = vmatprep.mubr.f32.mxu0 0.0
    %1488 = vmatmul.mubr.f32.gmra.mrb[0].mxu0 %v1402
    %v1489 = vpop.f32.mrb[0].mxu0
    %v1490 = vadd.f32 0.0, %v1489
    %v1491 = vpop.f32.mrb[0].mxu0
    %1492 = vmatprep.mubr.f32.mxu0 0.0
    %1493 = vmatmul.mubr.f32.gmra.mrb[0].mxu0 %v1403
    %v1494 = vpop.f32.mrb[0].mxu0
    %v1495 = vadd.f32 0.0, %v1494
    %v1496 = vpop.f32.mrb[0].mxu0
    %1497 = vmatprep.mubr.f32.mxu0 0.0
    %1498 = vmatmul.mubr.f32.gmra.mrb[0].mxu0 %v1404
    %v1499 = vpop.f32.mrb[0].mxu0
    %v1500 = vadd.f32 0.0, %v1499
    %v1501 = vpop.f32.mrb[0].mxu0
    %1502 = vmatprep.mubr.f32.mxu0 0.0
    %1503 = vmatmul.mubr.f32.gmra.mrb[0].mxu0 %v1405
    %v1504 = vpop.f32.mrb[0].mxu0
    %v1505 = vadd.f32 0.0, %v1504
    %v1506 = vpop.f32.mrb[0].mxu0
    %1507 = vdwg.mxu0
    %v1508 = vadd.f32 %v1384, %v1490
    %v1509 = vadd.f32 %v1389, %v1495
    %v1510 = vadd.f32 %v1394, %v1500
    %v1511 = vadd.f32 %v1399, %v1505
    %v1512 = vld [vmem:[%s6] sm:$0x1]
    %v1514 = vlaneseq
    %v1515 = vshrl.u32 %v1514, 7
    %v1516 = vsub.s32 0, %v1515
    %v1517 = vrot.slane %v1512, %v1516
    %v1519 = vadd.f32 %v1508, %v1517
    %v1520 = vadd.f32 %v1509, %v1517
    %v1521 = vadd.f32 %v1510, %v1517
    %v1522 = vadd.f32 %v1511, %v1517
    %v1523 = vld [vmem:[%s7] sm:$0x1]
    %v1524 = vld [vmem:[%s8] sm:$0x1]
    %v1525 = vld [vmem:[#allocation10] sm:$0xff]
    %v1526 = vld [vmem:[#allocation10 + $0x8] sm:$0xff]
    %v1527 = vld [vmem:[#allocation10 + $0x10] sm:$0xff]
    %v1528 = vld [vmem:[#allocation10 + $0x18] sm:$0xff]
    %v1529 = vld [vmem:[#allocation10 + $0x20] sm:$0xff]
    %v1530 = vld [vmem:[#allocation10 + $0x28] sm:$0xff]
    %v1531 = vld [vmem:[#allocation10 + $0x30] sm:$0xff]
    %v1532 = vld [vmem:[#allocation10 + $0x38] sm:$0xff]
    %v1533 = vld [vmem:[#allocation10 + $0x40] sm:$0xff]
    %v1534 = vld [vmem:[#allocation10 + $0x48] sm:$0xff]
    %v1535 = vld [vmem:[#allocation10 + $0x50] sm:$0xff]
    %v1536 = vld [vmem:[#allocation10 + $0x58] sm:$0xff]
    %v1537 = vld [vmem:[#allocation10 + $0x60] sm:$0xff]
    %v1538 = vld [vmem:[#allocation10 + $0x68] sm:$0xff]
    %v1539 = vld [vmem:[#allocation10 + $0x70] sm:$0xff]
    %v1540 = vld [vmem:[#allocation10 + $0x78] sm:$0xff]
    %v1541 = vmax.f32 %v1519, 0.0
    %v1542 = vmax.f32 %v1520, 0.0
    %v1543 = vmax.f32 %v1521, 0.0
    %v1544 = vmax.f32 %v1522, 0.0
    %v1545 = vadd.f32 %v1541, %v1542
    %v1546 = vadd.f32 %v1545, %v1543
    %v1547 = vadd.f32 %v1546, %v1544
    %v1548 = vrot.slane %v1547, 4
    %v1549 = vadd.f32 %v1547, %v1548
    %v1550 = vrot.slane %v1549, 2
    %v1551 = vadd.f32 %v1549, %v1550
    %v1552 = vrot.slane %v1551, 1
    %v1553 = vadd.f32 %v1551, %v1552
    %v1554 = vmul.f32 %v1541, %v1541
    %v1555 = vmul.f32 %v1542, %v1542
    %v1556 = vmul.f32 %v1543, %v1543
    %v1557 = vmul.f32 %v1544, %v1544
    %v1558 = vadd.f32 %v1554, %v1555
    %v1559 = vadd.f32 %v1558, %v1556
    %v1560 = vadd.f32 %v1559, %v1557
    %v1561 = vrot.slane %v1560, 4
    %v1562 = vadd.f32 %v1560, %v1561
    %v1563 = vrot.slane %v1562, 2
    %v1564 = vadd.f32 %v1562, %v1563
    %v1565 = vrot.slane %v1564, 1
    %v1566 = vadd.f32 %v1564, %v1565
    %v1567 = vsel %vm494, %v1553, %v1566
    %1568 = vmatprep.subr.mxu0 0.0
    %v1569 = vand.u32 %v1525, 4294901760
    %1570 = vmatpush1.msra.mxu0 %v1569
    %1571 = vmatprep.subr.mxu0 0.0
    %v1572 = vand.u32 %v1526, 4294901760
    %1573 = vmatpush1.msra.mxu0 %v1572
    %1574 = vmatprep.subr.mxu0 0.0
    %v1575 = vand.u32 %v1527, 4294901760
    %1576 = vmatpush1.msra.mxu0 %v1575
    %1577 = vmatprep.subr.mxu0 0.0
    %v1578 = vand.u32 %v1528, 4294901760
    %1579 = vmatpush1.msra.mxu0 %v1578
    %1580 = vmatprep.subr.mxu0 0.0
    %v1581 = vand.u32 %v1529, 4294901760
    %1582 = vmatpush1.msra.mxu0 %v1581
    %1583 = vmatprep.subr.mxu0 0.0
    %v1584 = vand.u32 %v1530, 4294901760
    %1585 = vmatpush1.msra.mxu0 %v1584
    %1586 = vmatprep.subr.mxu0 0.0
    %v1587 = vand.u32 %v1531, 4294901760
    %1588 = vmatpush1.msra.mxu0 %v1587
    %1589 = vmatprep.subr.mxu0 0.0
    %v1590 = vand.u32 %v1532, 4294901760
    %1591 = vmatpush1.msra.mxu0 %v1590
    %1592 = vmatprep.subr.mxu0 0.0
    %v1593 = vand.u32 %v1533, 4294901760
    %1594 = vmatpush1.msra.mxu0 %v1593
    %1595 = vmatprep.subr.mxu0 0.0
    %v1596 = vand.u32 %v1534, 4294901760
    %1597 = vmatpush1.msra.mxu0 %v1596
    %1598 = vmatprep.subr.mxu0 0.0
    %v1599 = vand.u32 %v1535, 4294901760
    %1600 = vmatpush1.msra.mxu0 %v1599
    %1601 = vmatprep.subr.mxu0 0.0
    %v1602 = vand.u32 %v1536, 4294901760
    %1603 = vmatpush1.msra.mxu0 %v1602
    %1604 = vmatprep.subr.mxu0 0.0
    %v1605 = vand.u32 %v1537, 4294901760
    %1606 = vmatpush1.msra.mxu0 %v1605
    %1607 = vmatprep.subr.mxu0 0.0
    %v1608 = vand.u32 %v1538, 4294901760
    %1609 = vmatpush1.msra.mxu0 %v1608
    %1610 = vmatprep.subr.mxu0 0.0
    %v1611 = vand.u32 %v1539, 4294901760
    %1612 = vmatpush1.msra.mxu0 %v1611
    %1613 = vmatprep.subr.mxu0 0.0
    %v1614 = vand.u32 %v1540, 4294901760
    %1615 = vmatpush1.msra.mxu0 %v1614
    %1616 = vmatprep.subr.mxu0 0.0
    %1617 = vmatpush1.msra.mxu0 0.0
    %1618 = vmatprep.subr.mxu0 0.0
    %1619 = vmatpush1.msra.mxu0 0.0
    %1620 = vmatprep.subr.mxu0 0.0
    %1621 = vmatpush1.msra.mxu0 0.0
    %1622 = vmatprep.subr.mxu0 0.0
    %1623 = vmatpush1.msra.mxu0 0.0
    %1624 = vmatprep.subr.mxu0 0.0
    %1625 = vmatpush1.msra.mxu0 0.0
    %1626 = vmatprep.subr.mxu0 0.0
    %1627 = vmatpush1.msra.mxu0 0.0
    %1628 = vmatprep.subr.mxu0 0.0
    %1629 = vmatpush1.msra.mxu0 0.0
    %1630 = vmatprep.subr.mxu0 0.0
    %1631 = vmatpush1.msra.mxu0 0.0
    %1632 = vmatprep.subr.mxu0 0.0
    %1633 = vmatpush1.msra.mxu0 0.0
    %1634 = vmatprep.subr.mxu0 0.0
    %1635 = vmatpush1.msra.mxu0 0.0
    %1636 = vmatprep.subr.mxu0 0.0
    %1637 = vmatpush1.msra.mxu0 0.0
    %1638 = vmatprep.subr.mxu0 0.0
    %1639 = vmatpush1.msra.mxu0 0.0
    %1640 = vmatprep.subr.mxu0 0.0
    %1641 = vmatpush1.msra.mxu0 0.0
    %1642 = vmatprep.subr.mxu0 0.0
    %1643 = vmatpush1.msra.mxu0 0.0
    %1644 = vmatprep.subr.mxu0 0.0
    %1645 = vmatpush1.msra.mxu0 0.0
    %1646 = vmatprep.subr.mxu0 0.0
    %1647 = vmatpush1.msra.mxu0 0.0
    %1648 = vmatprep.mubr.f32.mxu0 0.0
    %v1649 = vand.u32 %v1567, 4294901760
    %v1650 = vsub.f32 %v1567, %v1649
    %v1651 = vand.u32 %v1650, 4294901760
    %v1652 = vsub.f32 %v1650, %v1651
    %v1653 = vand.u32 %v1652, 4294901760
    %1654 = vmatmul.mubr.f32.gmra.mrb[0].mxu0 %v1653
    %v1655 = vpop.f32.mrb[0].mxu0
    %v1656 = vadd.f32 0.0, %v1655
    %v1657 = vpop.f32.mrb[0].mxu0
    %1658 = vdwg.mxu0
    %1659 = vmatprep.subr.mxu0 0.0
    %v1660 = vand.u32 %v1525, 4294901760
    %v1661 = vsub.f32 %v1525, %v1660
    %v1662 = vand.u32 %v1661, 4294901760
    %v1663 = vsub.f32 %v1661, %v1662
    %v1664 = vand.u32 %v1663, 4294901760
    %1665 = vmatpush1.msra.mxu0 %v1664
    %1666 = vmatprep.subr.mxu0 0.0
    %v1667 = vand.u32 %v1526, 4294901760
    %v1668 = vsub.f32 %v1526, %v1667
    %v1669 = vand.u32 %v1668, 4294901760
    %v1670 = vsub.f32 %v1668, %v1669
    %v1671 = vand.u32 %v1670, 4294901760
    %1672 = vmatpush1.msra.mxu0 %v1671
    %1673 = vmatprep.subr.mxu0 0.0
    %v1674 = vand.u32 %v1527, 4294901760
    %v1675 = vsub.f32 %v1527, %v1674
    %v1676 = vand.u32 %v1675, 4294901760
    %v1677 = vsub.f32 %v1675, %v1676
    %v1678 = vand.u32 %v1677, 4294901760
    %1679 = vmatpush1.msra.mxu0 %v1678
    %1680 = vmatprep.subr.mxu0 0.0
    %v1681 = vand.u32 %v1528, 4294901760
    %v1682 = vsub.f32 %v1528, %v1681
    %v1683 = vand.u32 %v1682, 4294901760
    %v1684 = vsub.f32 %v1682, %v1683
    %v1685 = vand.u32 %v1684, 4294901760
    %1686 = vmatpush1.msra.mxu0 %v1685
    %1687 = vmatprep.subr.mxu0 0.0
    %v1688 = vand.u32 %v1529, 4294901760
    %v1689 = vsub.f32 %v1529, %v1688
    %v1690 = vand.u32 %v1689, 4294901760
    %v1691 = vsub.f32 %v1689, %v1690
    %v1692 = vand.u32 %v1691, 4294901760
    %1693 = vmatpush1.msra.mxu0 %v1692
    %1694 = vmatprep.subr.mxu0 0.0
    %v1695 = vand.u32 %v1530, 4294901760
    %v1696 = vsub.f32 %v1530, %v1695
    %v1697 = vand.u32 %v1696, 4294901760
    %v1698 = vsub.f32 %v1696, %v1697
    %v1699 = vand.u32 %v1698, 4294901760
    %1700 = vmatpush1.msra.mxu0 %v1699
    %1701 = vmatprep.subr.mxu0 0.0
    %v1702 = vand.u32 %v1531, 4294901760
    %v1703 = vsub.f32 %v1531, %v1702
    %v1704 = vand.u32 %v1703, 4294901760
    %v1705 = vsub.f32 %v1703, %v1704
    %v1706 = vand.u32 %v1705, 4294901760
    %1707 = vmatpush1.msra.mxu0 %v1706
    %1708 = vmatprep.subr.mxu0 0.0
    %v1709 = vand.u32 %v1532, 4294901760
    %v1710 = vsub.f32 %v1532, %v1709
    %v1711 = vand.u32 %v1710, 4294901760
    %v1712 = vsub.f32 %v1710, %v1711
    %v1713 = vand.u32 %v1712, 4294901760
    %1714 = vmatpush1.msra.mxu0 %v1713
    %1715 = vmatprep.subr.mxu0 0.0
    %v1716 = vand.u32 %v1533, 4294901760
    %v1717 = vsub.f32 %v1533, %v1716
    %v1718 = vand.u32 %v1717, 4294901760
    %v1719 = vsub.f32 %v1717, %v1718
    %v1720 = vand.u32 %v1719, 4294901760
    %1721 = vmatpush1.msra.mxu0 %v1720
    %1722 = vmatprep.subr.mxu0 0.0
    %v1723 = vand.u32 %v1534, 4294901760
    %v1724 = vsub.f32 %v1534, %v1723
    %v1725 = vand.u32 %v1724, 4294901760
    %v1726 = vsub.f32 %v1724, %v1725
    %v1727 = vand.u32 %v1726, 4294901760
    %1728 = vmatpush1.msra.mxu0 %v1727
    %1729 = vmatprep.subr.mxu0 0.0
    %v1730 = vand.u32 %v1535, 4294901760
    %v1731 = vsub.f32 %v1535, %v1730
    %v1732 = vand.u32 %v1731, 4294901760
    %v1733 = vsub.f32 %v1731, %v1732
    %v1734 = vand.u32 %v1733, 4294901760
    %1735 = vmatpush1.msra.mxu0 %v1734
    %1736 = vmatprep.subr.mxu0 0.0
    %v1737 = vand.u32 %v1536, 4294901760
    %v1738 = vsub.f32 %v1536, %v1737
    %v1739 = vand.u32 %v1738, 4294901760
    %v1740 = vsub.f32 %v1738, %v1739
    %v1741 = vand.u32 %v1740, 4294901760
    %1742 = vmatpush1.msra.mxu0 %v1741
    %1743 = vmatprep.subr.mxu0 0.0
    %v1744 = vand.u32 %v1537, 4294901760
    %v1745 = vsub.f32 %v1537, %v1744
    %v1746 = vand.u32 %v1745, 4294901760
    %v1747 = vsub.f32 %v1745, %v1746
    %v1748 = vand.u32 %v1747, 4294901760
    %1749 = vmatpush1.msra.mxu0 %v1748
    %1750 = vmatprep.subr.mxu0 0.0
    %v1751 = vand.u32 %v1538, 4294901760
    %v1752 = vsub.f32 %v1538, %v1751
    %v1753 = vand.u32 %v1752, 4294901760
    %v1754 = vsub.f32 %v1752, %v1753
    %v1755 = vand.u32 %v1754, 4294901760
    %1756 = vmatpush1.msra.mxu0 %v1755
    %1757 = vmatprep.subr.mxu0 0.0
    %v1758 = vand.u32 %v1539, 4294901760
    %v1759 = vsub.f32 %v1539, %v1758
    %v1760 = vand.u32 %v1759, 4294901760
    %v1761 = vsub.f32 %v1759, %v1760
    %v1762 = vand.u32 %v1761, 4294901760
    %1763 = vmatpush1.msra.mxu0 %v1762
    %1764 = vmatprep.subr.mxu0 0.0
    %v1765 = vand.u32 %v1540, 4294901760
    %v1766 = vsub.f32 %v1540, %v1765
    %v1767 = vand.u32 %v1766, 4294901760
    %v1768 = vsub.f32 %v1766, %v1767
    %v1769 = vand.u32 %v1768, 4294901760
    %1770 = vmatpush1.msra.mxu0 %v1769
    %1771 = vmatprep.subr.mxu0 0.0
    %1772 = vmatpush1.msra.mxu0 0.0
    %1773 = vmatprep.subr.mxu0 0.0
    %1774 = vmatpush1.msra.mxu0 0.0
    %1775 = vmatprep.subr.mxu0 0.0
    %1776 = vmatpush1.msra.mxu0 0.0
    %1777 = vmatprep.subr.mxu0 0.0
    %1778 = vmatpush1.msra.mxu0 0.0
    %1779 = vmatprep.subr.mxu0 0.0
    %1780 = vmatpush1.msra.mxu0 0.0
    %1781 = vmatprep.subr.mxu0 0.0
    %1782 = vmatpush1.msra.mxu0 0.0
    %1783 = vmatprep.subr.mxu0 0.0
    %1784 = vmatpush1.msra.mxu0 0.0
    %1785 = vmatprep.subr.mxu0 0.0
    %1786 = vmatpush1.msra.mxu0 0.0
    %1787 = vmatprep.subr.mxu0 0.0
    %1788 = vmatpush1.msra.mxu0 0.0
    %1789 = vmatprep.subr.mxu0 0.0
    %1790 = vmatpush1.msra.mxu0 0.0
    %1791 = vmatprep.subr.mxu0 0.0
    %1792 = vmatpush1.msra.mxu0 0.0
    %1793 = vmatprep.subr.mxu0 0.0
    %1794 = vmatpush1.msra.mxu0 0.0
    %1795 = vmatprep.subr.mxu0 0.0
    %1796 = vmatpush1.msra.mxu0 0.0
    %1797 = vmatprep.subr.mxu0 0.0
    %1798 = vmatpush1.msra.mxu0 0.0
    %1799 = vmatprep.subr.mxu0 0.0
    %1800 = vmatpush1.msra.mxu0 0.0
    %1801 = vmatprep.subr.mxu0 0.0
    %1802 = vmatpush1.msra.mxu0 0.0
    %1803 = vmatprep.mubr.f32.mxu0 0.0
    %v1804 = vand.u32 %v1567, 4294901760
    %1805 = vmatmul.mubr.f32.gmra.mrb[0].mxu0 %v1804
    %v1806 = vpop.f32.mrb[0].mxu0
    %v1807 = vadd.f32 %v1656, %v1806
    %v1808 = vpop.f32.mrb[0].mxu0
    %1809 = vdwg.mxu0
    %1810 = vmatprep.subr.mxu0 0.0
    %v1811 = vand.u32 %v1525, 4294901760
    %v1812 = vsub.f32 %v1525, %v1811
    %1813 = vmatpush1.msra.mxu0 %v1812
    %1814 = vmatprep.subr.mxu0 0.0
    %v1815 = vand.u32 %v1526, 4294901760
    %v1816 = vsub.f32 %v1526, %v1815
    %1817 = vmatpush1.msra.mxu0 %v1816
    %1818 = vmatprep.subr.mxu0 0.0
    %v1819 = vand.u32 %v1527, 4294901760
    %v1820 = vsub.f32 %v1527, %v1819
    %1821 = vmatpush1.msra.mxu0 %v1820
    %1822 = vmatprep.subr.mxu0 0.0
    %v1823 = vand.u32 %v1528, 4294901760
    %v1824 = vsub.f32 %v1528, %v1823
    %1825 = vmatpush1.msra.mxu0 %v1824
    %1826 = vmatprep.subr.mxu0 0.0
    %v1827 = vand.u32 %v1529, 4294901760
    %v1828 = vsub.f32 %v1529, %v1827
    %1829 = vmatpush1.msra.mxu0 %v1828
    %1830 = vmatprep.subr.mxu0 0.0
    %v1831 = vand.u32 %v1530, 4294901760
    %v1832 = vsub.f32 %v1530, %v1831
    %1833 = vmatpush1.msra.mxu0 %v1832
    %1834 = vmatprep.subr.mxu0 0.0
    %v1835 = vand.u32 %v1531, 4294901760
    %v1836 = vsub.f32 %v1531, %v1835
    %1837 = vmatpush1.msra.mxu0 %v1836
    %1838 = vmatprep.subr.mxu0 0.0
    %v1839 = vand.u32 %v1532, 4294901760
    %v1840 = vsub.f32 %v1532, %v1839
    %1841 = vmatpush1.msra.mxu0 %v1840
    %1842 = vmatprep.subr.mxu0 0.0
    %v1843 = vand.u32 %v1533, 4294901760
    %v1844 = vsub.f32 %v1533, %v1843
    %1845 = vmatpush1.msra.mxu0 %v1844
    %1846 = vmatprep.subr.mxu0 0.0
    %v1847 = vand.u32 %v1534, 4294901760
    %v1848 = vsub.f32 %v1534, %v1847
    %1849 = vmatpush1.msra.mxu0 %v1848
    %1850 = vmatprep.subr.mxu0 0.0
    %v1851 = vand.u32 %v1535, 4294901760
    %v1852 = vsub.f32 %v1535, %v1851
    %1853 = vmatpush1.msra.mxu0 %v1852
    %1854 = vmatprep.subr.mxu0 0.0
    %v1855 = vand.u32 %v1536, 4294901760
    %v1856 = vsub.f32 %v1536, %v1855
    %1857 = vmatpush1.msra.mxu0 %v1856
    %1858 = vmatprep.subr.mxu0 0.0
    %v1859 = vand.u32 %v1537, 4294901760
    %v1860 = vsub.f32 %v1537, %v1859
    %1861 = vmatpush1.msra.mxu0 %v1860
    %1862 = vmatprep.subr.mxu0 0.0
    %v1863 = vand.u32 %v1538, 4294901760
    %v1864 = vsub.f32 %v1538, %v1863
    %1865 = vmatpush1.msra.mxu0 %v1864
    %1866 = vmatprep.subr.mxu0 0.0
    %v1867 = vand.u32 %v1539, 4294901760
    %v1868 = vsub.f32 %v1539, %v1867
    %1869 = vmatpush1.msra.mxu0 %v1868
    %1870 = vmatprep.subr.mxu0 0.0
    %v1871 = vand.u32 %v1540, 4294901760
    %v1872 = vsub.f32 %v1540, %v1871
    %1873 = vmatpush1.msra.mxu0 %v1872
    %1874 = vmatprep.subr.mxu0 0.0
    %1875 = vmatpush1.msra.mxu0 0.0
    %1876 = vmatprep.subr.mxu0 0.0
    %1877 = vmatpush1.msra.mxu0 0.0
    %1878 = vmatprep.subr.mxu0 0.0
    %1879 = vmatpush1.msra.mxu0 0.0
    %1880 = vmatprep.subr.mxu0 0.0
    %1881 = vmatpush1.msra.mxu0 0.0
    %1882 = vmatprep.subr.mxu0 0.0
    %1883 = vmatpush1.msra.mxu0 0.0
    %1884 = vmatprep.subr.mxu0 0.0
    %1885 = vmatpush1.msra.mxu0 0.0
    %1886 = vmatprep.subr.mxu0 0.0
    %1887 = vmatpush1.msra.mxu0 0.0
    %1888 = vmatprep.subr.mxu0 0.0
    %1889 = vmatpush1.msra.mxu0 0.0
    %1890 = vmatprep.subr.mxu0 0.0
    %1891 = vmatpush1.msra.mxu0 0.0
    %1892 = vmatprep.subr.mxu0 0.0
    %1893 = vmatpush1.msra.mxu0 0.0
    %1894 = vmatprep.subr.mxu0 0.0
    %1895 = vmatpush1.msra.mxu0 0.0
    %1896 = vmatprep.subr.mxu0 0.0
    %1897 = vmatpush1.msra.mxu0 0.0
    %1898 = vmatprep.subr.mxu0 0.0
    %1899 = vmatpush1.msra.mxu0 0.0
    %1900 = vmatprep.subr.mxu0 0.0
    %1901 = vmatpush1.msra.mxu0 0.0
    %1902 = vmatprep.subr.mxu0 0.0
    %1903 = vmatpush1.msra.mxu0 0.0
    %1904 = vmatprep.subr.mxu0 0.0
    %1905 = vmatpush1.msra.mxu0 0.0
    %1906 = vmatprep.mubr.f32.mxu0 0.0
    %v1907 = vand.u32 %v1567, 4294901760
    %v1908 = vsub.f32 %v1567, %v1907
    %1909 = vmatmul.mubr.f32.gmra.mrb[0].mxu0 %v1908
    %v1910 = vpop.f32.mrb[0].mxu0
    %v1911 = vadd.f32 %v1807, %v1910
    %v1912 = vpop.f32.mrb[0].mxu0
    %1913 = vdwg.mxu0
    %1914 = vmatprep.subr.mxu0 0.0
    %v1915 = vand.u32 %v1525, 4294901760
    %1916 = vmatpush1.msra.mxu0 %v1915
    %1917 = vmatprep.subr.mxu0 0.0
    %v1918 = vand.u32 %v1526, 4294901760
    %1919 = vmatpush1.msra.mxu0 %v1918
    %1920 = vmatprep.subr.mxu0 0.0
    %v1921 = vand.u32 %v1527, 4294901760
    %1922 = vmatpush1.msra.mxu0 %v1921
    %1923 = vmatprep.subr.mxu0 0.0
    %v1924 = vand.u32 %v1528, 4294901760
    %1925 = vmatpush1.msra.mxu0 %v1924
    %1926 = vmatprep.subr.mxu0 0.0
    %v1927 = vand.u32 %v1529, 4294901760
    %1928 = vmatpush1.msra.mxu0 %v1927
    %1929 = vmatprep.subr.mxu0 0.0
    %v1930 = vand.u32 %v1530, 4294901760
    %1931 = vmatpush1.msra.mxu0 %v1930
    %1932 = vmatprep.subr.mxu0 0.0
    %v1933 = vand.u32 %v1531, 4294901760
    %1934 = vmatpush1.msra.mxu0 %v1933
    %1935 = vmatprep.subr.mxu0 0.0
    %v1936 = vand.u32 %v1532, 4294901760
    %1937 = vmatpush1.msra.mxu0 %v1936
    %1938 = vmatprep.subr.mxu0 0.0
    %v1939 = vand.u32 %v1533, 4294901760
    %1940 = vmatpush1.msra.mxu0 %v1939
    %1941 = vmatprep.subr.mxu0 0.0
    %v1942 = vand.u32 %v1534, 4294901760
    %1943 = vmatpush1.msra.mxu0 %v1942
    %1944 = vmatprep.subr.mxu0 0.0
    %v1945 = vand.u32 %v1535, 4294901760
    %1946 = vmatpush1.msra.mxu0 %v1945
    %1947 = vmatprep.subr.mxu0 0.0
    %v1948 = vand.u32 %v1536, 4294901760
    %1949 = vmatpush1.msra.mxu0 %v1948
    %1950 = vmatprep.subr.mxu0 0.0
    %v1951 = vand.u32 %v1537, 4294901760
    %1952 = vmatpush1.msra.mxu0 %v1951
    %1953 = vmatprep.subr.mxu0 0.0
    %v1954 = vand.u32 %v1538, 4294901760
    %1955 = vmatpush1.msra.mxu0 %v1954
    %1956 = vmatprep.subr.mxu0 0.0
    %v1957 = vand.u32 %v1539, 4294901760
    %1958 = vmatpush1.msra.mxu0 %v1957
    %1959 = vmatprep.subr.mxu0 0.0
    %v1960 = vand.u32 %v1540, 4294901760
    %1961 = vmatpush1.msra.mxu0 %v1960
    %1962 = vmatprep.subr.mxu0 0.0
    %1963 = vmatpush1.msra.mxu0 0.0
    %1964 = vmatprep.subr.mxu0 0.0
    %1965 = vmatpush1.msra.mxu0 0.0
    %1966 = vmatprep.subr.mxu0 0.0
    %1967 = vmatpush1.msra.mxu0 0.0
    %1968 = vmatprep.subr.mxu0 0.0
    %1969 = vmatpush1.msra.mxu0 0.0
    %1970 = vmatprep.subr.mxu0 0.0
    %1971 = vmatpush1.msra.mxu0 0.0
    %1972 = vmatprep.subr.mxu0 0.0
    %1973 = vmatpush1.msra.mxu0 0.0
    %1974 = vmatprep.subr.mxu0 0.0
    %1975 = vmatpush1.msra.mxu0 0.0
    %1976 = vmatprep.subr.mxu0 0.0
    %1977 = vmatpush1.msra.mxu0 0.0
    %1978 = vmatprep.subr.mxu0 0.0
    %1979 = vmatpush1.msra.mxu0 0.0
    %1980 = vmatprep.subr.mxu0 0.0
    %1981 = vmatpush1.msra.mxu0 0.0
    %1982 = vmatprep.subr.mxu0 0.0
    %1983 = vmatpush1.msra.mxu0 0.0
    %1984 = vmatprep.subr.mxu0 0.0
    %1985 = vmatpush1.msra.mxu0 0.0
    %1986 = vmatprep.subr.mxu0 0.0
    %1987 = vmatpush1.msra.mxu0 0.0
    %1988 = vmatprep.subr.mxu0 0.0
    %1989 = vmatpush1.msra.mxu0 0.0
    %1990 = vmatprep.subr.mxu0 0.0
    %1991 = vmatpush1.msra.mxu0 0.0
    %1992 = vmatprep.subr.mxu0 0.0
    %1993 = vmatpush1.msra.mxu0 0.0
    %1994 = vmatprep.mubr.f32.mxu0 0.0
    %v1995 = vand.u32 %v1567, 4294901760
    %v1996 = vsub.f32 %v1567, %v1995
    %v1997 = vand.u32 %v1996, 4294901760
    %1998 = vmatmul.mubr.f32.gmra.mrb[0].mxu0 %v1997
    %v1999 = vpop.f32.mrb[0].mxu0
    %v2000 = vadd.f32 %v1911, %v1999
    %v2001 = vpop.f32.mrb[0].mxu0
    %2002 = vdwg.mxu0
    %2003 = vmatprep.subr.mxu0 0.0
    %v2004 = vand.u32 %v1525, 4294901760
    %v2005 = vsub.f32 %v1525, %v2004
    %v2006 = vand.u32 %v2005, 4294901760
    %2007 = vmatpush1.msra.mxu0 %v2006
    %2008 = vmatprep.subr.mxu0 0.0
    %v2009 = vand.u32 %v1526, 4294901760
    %v2010 = vsub.f32 %v1526, %v2009
    %v2011 = vand.u32 %v2010, 4294901760
    %2012 = vmatpush1.msra.mxu0 %v2011
    %2013 = vmatprep.subr.mxu0 0.0
    %v2014 = vand.u32 %v1527, 4294901760
    %v2015 = vsub.f32 %v1527, %v2014
    %v2016 = vand.u32 %v2015, 4294901760
    %2017 = vmatpush1.msra.mxu0 %v2016
    %2018 = vmatprep.subr.mxu0 0.0
    %v2019 = vand.u32 %v1528, 4294901760
    %v2020 = vsub.f32 %v1528, %v2019
    %v2021 = vand.u32 %v2020, 4294901760
    %2022 = vmatpush1.msra.mxu0 %v2021
    %2023 = vmatprep.subr.mxu0 0.0
    %v2024 = vand.u32 %v1529, 4294901760
    %v2025 = vsub.f32 %v1529, %v2024
    %v2026 = vand.u32 %v2025, 4294901760
    %2027 = vmatpush1.msra.mxu0 %v2026
    %2028 = vmatprep.subr.mxu0 0.0
    %v2029 = vand.u32 %v1530, 4294901760
    %v2030 = vsub.f32 %v1530, %v2029
    %v2031 = vand.u32 %v2030, 4294901760
    %2032 = vmatpush1.msra.mxu0 %v2031
    %2033 = vmatprep.subr.mxu0 0.0
    %v2034 = vand.u32 %v1531, 4294901760
    %v2035 = vsub.f32 %v1531, %v2034
    %v2036 = vand.u32 %v2035, 4294901760
    %2037 = vmatpush1.msra.mxu0 %v2036
    %2038 = vmatprep.subr.mxu0 0.0
    %v2039 = vand.u32 %v1532, 4294901760
    %v2040 = vsub.f32 %v1532, %v2039
    %v2041 = vand.u32 %v2040, 4294901760
    %2042 = vmatpush1.msra.mxu0 %v2041
    %2043 = vmatprep.subr.mxu0 0.0
    %v2044 = vand.u32 %v1533, 4294901760
    %v2045 = vsub.f32 %v1533, %v2044
    %v2046 = vand.u32 %v2045, 4294901760
    %2047 = vmatpush1.msra.mxu0 %v2046
    %2048 = vmatprep.subr.mxu0 0.0
    %v2049 = vand.u32 %v1534, 4294901760
    %v2050 = vsub.f32 %v1534, %v2049
    %v2051 = vand.u32 %v2050, 4294901760
    %2052 = vmatpush1.msra.mxu0 %v2051
    %2053 = vmatprep.subr.mxu0 0.0
    %v2054 = vand.u32 %v1535, 4294901760
    %v2055 = vsub.f32 %v1535, %v2054
    %v2056 = vand.u32 %v2055, 4294901760
    %2057 = vmatpush1.msra.mxu0 %v2056
    %2058 = vmatprep.subr.mxu0 0.0
    %v2059 = vand.u32 %v1536, 4294901760
    %v2060 = vsub.f32 %v1536, %v2059
    %v2061 = vand.u32 %v2060, 4294901760
    %2062 = vmatpush1.msra.mxu0 %v2061
    %2063 = vmatprep.subr.mxu0 0.0
    %v2064 = vand.u32 %v1537, 4294901760
    %v2065 = vsub.f32 %v1537, %v2064
    %v2066 = vand.u32 %v2065, 4294901760
    %2067 = vmatpush1.msra.mxu0 %v2066
    %2068 = vmatprep.subr.mxu0 0.0
    %v2069 = vand.u32 %v1538, 4294901760
    %v2070 = vsub.f32 %v1538, %v2069
    %v2071 = vand.u32 %v2070, 4294901760
    %2072 = vmatpush1.msra.mxu0 %v2071
    %2073 = vmatprep.subr.mxu0 0.0
    %v2074 = vand.u32 %v1539, 4294901760
    %v2075 = vsub.f32 %v1539, %v2074
    %v2076 = vand.u32 %v2075, 4294901760
    %2077 = vmatpush1.msra.mxu0 %v2076
    %2078 = vmatprep.subr.mxu0 0.0
    %v2079 = vand.u32 %v1540, 4294901760
    %v2080 = vsub.f32 %v1540, %v2079
    %v2081 = vand.u32 %v2080, 4294901760
    %2082 = vmatpush1.msra.mxu0 %v2081
    %2083 = vmatprep.subr.mxu0 0.0
    %2084 = vmatpush1.msra.mxu0 0.0
    %2085 = vmatprep.subr.mxu0 0.0
    %2086 = vmatpush1.msra.mxu0 0.0
    %2087 = vmatprep.subr.mxu0 0.0
    %2088 = vmatpush1.msra.mxu0 0.0
    %2089 = vmatprep.subr.mxu0 0.0
    %2090 = vmatpush1.msra.mxu0 0.0
    %2091 = vmatprep.subr.mxu0 0.0
    %2092 = vmatpush1.msra.mxu0 0.0
    %2093 = vmatprep.subr.mxu0 0.0
    %2094 = vmatpush1.msra.mxu0 0.0
    %2095 = vmatprep.subr.mxu0 0.0
    %2096 = vmatpush1.msra.mxu0 0.0
    %2097 = vmatprep.subr.mxu0 0.0
    %2098 = vmatpush1.msra.mxu0 0.0
    %2099 = vmatprep.subr.mxu0 0.0
    %2100 = vmatpush1.msra.mxu0 0.0
    %2101 = vmatprep.subr.mxu0 0.0
    %2102 = vmatpush1.msra.mxu0 0.0
    %2103 = vmatprep.subr.mxu0 0.0
    %2104 = vmatpush1.msra.mxu0 0.0
    %2105 = vmatprep.subr.mxu0 0.0
    %2106 = vmatpush1.msra.mxu0 0.0
    %2107 = vmatprep.subr.mxu0 0.0
    %2108 = vmatpush1.msra.mxu0 0.0
    %2109 = vmatprep.subr.mxu0 0.0
    %2110 = vmatpush1.msra.mxu0 0.0
    %2111 = vmatprep.subr.mxu0 0.0
    %2112 = vmatpush1.msra.mxu0 0.0
    %2113 = vmatprep.subr.mxu0 0.0
    %2114 = vmatpush1.msra.mxu0 0.0
    %2115 = vmatprep.mubr.f32.mxu0 0.0
    %v2116 = vand.u32 %v1567, 4294901760
    %2117 = vmatmul.mubr.f32.gmra.mrb[0].mxu0 %v2116
    %v2118 = vpop.f32.mrb[0].mxu0
    %v2119 = vadd.f32 %v2000, %v2118
    %v2120 = vpop.f32.mrb[0].mxu0
    %2121 = vdwg.mxu0
    %2122 = vmatprep.subr.mxu0 0.0
    %v2123 = vand.u32 %v1525, 4294901760
    %2124 = vmatpush1.msra.mxu0 %v2123
    %2125 = vmatprep.subr.mxu0 0.0
    %v2126 = vand.u32 %v1526, 4294901760
    %2127 = vmatpush1.msra.mxu0 %v2126
    %2128 = vmatprep.subr.mxu0 0.0
    %v2129 = vand.u32 %v1527, 4294901760
    %2130 = vmatpush1.msra.mxu0 %v2129
    %2131 = vmatprep.subr.mxu0 0.0
    %v2132 = vand.u32 %v1528, 4294901760
    %2133 = vmatpush1.msra.mxu0 %v2132
    %2134 = vmatprep.subr.mxu0 0.0
    %v2135 = vand.u32 %v1529, 4294901760
    %2136 = vmatpush1.msra.mxu0 %v2135
    %2137 = vmatprep.subr.mxu0 0.0
    %v2138 = vand.u32 %v1530, 4294901760
    %2139 = vmatpush1.msra.mxu0 %v2138
    %2140 = vmatprep.subr.mxu0 0.0
    %v2141 = vand.u32 %v1531, 4294901760
    %2142 = vmatpush1.msra.mxu0 %v2141
    %2143 = vmatprep.subr.mxu0 0.0
    %v2144 = vand.u32 %v1532, 4294901760
    %2145 = vmatpush1.msra.mxu0 %v2144
    %2146 = vmatprep.subr.mxu0 0.0
    %v2147 = vand.u32 %v1533, 4294901760
    %2148 = vmatpush1.msra.mxu0 %v2147
    %2149 = vmatprep.subr.mxu0 0.0
    %v2150 = vand.u32 %v1534, 4294901760
    %2151 = vmatpush1.msra.mxu0 %v2150
    %2152 = vmatprep.subr.mxu0 0.0
    %v2153 = vand.u32 %v1535, 4294901760
    %2154 = vmatpush1.msra.mxu0 %v2153
    %2155 = vmatprep.subr.mxu0 0.0
    %v2156 = vand.u32 %v1536, 4294901760
    %2157 = vmatpush1.msra.mxu0 %v2156
    %2158 = vmatprep.subr.mxu0 0.0
    %v2159 = vand.u32 %v1537, 4294901760
    %2160 = vmatpush1.msra.mxu0 %v2159
    %2161 = vmatprep.subr.mxu0 0.0
    %v2162 = vand.u32 %v1538, 4294901760
    %2163 = vmatpush1.msra.mxu0 %v2162
    %2164 = vmatprep.subr.mxu0 0.0
    %v2165 = vand.u32 %v1539, 4294901760
    %2166 = vmatpush1.msra.mxu0 %v2165
    %2167 = vmatprep.subr.mxu0 0.0
    %v2168 = vand.u32 %v1540, 4294901760
    %2169 = vmatpush1.msra.mxu0 %v2168
    %2170 = vmatprep.subr.mxu0 0.0
    %2171 = vmatpush1.msra.mxu0 0.0
    %2172 = vmatprep.subr.mxu0 0.0
    %2173 = vmatpush1.msra.mxu0 0.0
    %2174 = vmatprep.subr.mxu0 0.0
    %2175 = vmatpush1.msra.mxu0 0.0
    %2176 = vmatprep.subr.mxu0 0.0
    %2177 = vmatpush1.msra.mxu0 0.0
    %2178 = vmatprep.subr.mxu0 0.0
    %2179 = vmatpush1.msra.mxu0 0.0
    %2180 = vmatprep.subr.mxu0 0.0
    %2181 = vmatpush1.msra.mxu0 0.0
    %2182 = vmatprep.subr.mxu0 0.0
    %2183 = vmatpush1.msra.mxu0 0.0
    %2184 = vmatprep.subr.mxu0 0.0
    %2185 = vmatpush1.msra.mxu0 0.0
    %2186 = vmatprep.subr.mxu0 0.0
    %2187 = vmatpush1.msra.mxu0 0.0
    %2188 = vmatprep.subr.mxu0 0.0
    %2189 = vmatpush1.msra.mxu0 0.0
    %2190 = vmatprep.subr.mxu0 0.0
    %2191 = vmatpush1.msra.mxu0 0.0
    %2192 = vmatprep.subr.mxu0 0.0
    %2193 = vmatpush1.msra.mxu0 0.0
    %2194 = vmatprep.subr.mxu0 0.0
    %2195 = vmatpush1.msra.mxu0 0.0
    %2196 = vmatprep.subr.mxu0 0.0
    %2197 = vmatpush1.msra.mxu0 0.0
    %2198 = vmatprep.subr.mxu0 0.0
    %2199 = vmatpush1.msra.mxu0 0.0
    %2200 = vmatprep.subr.mxu0 0.0
    %2201 = vmatpush1.msra.mxu0 0.0
    %2202 = vmatprep.mubr.f32.mxu0 0.0
    %v2203 = vand.u32 %v1567, 4294901760
    %2204 = vmatmul.mubr.f32.gmra.mrb[0].mxu0 %v2203
    %v2205 = vpop.f32.mrb[0].mxu0
    %v2206 = vadd.f32 %v2119, %v2205
    %v2207 = vpop.f32.mrb[0].mxu0
    %2208 = vdwg.mxu0
    %v2209 = vmul.f32 %v2206, %v2206
    %v2211 = vrot.slane %v2209, 7
    %v2213 = vsub.f32 %v2206, %v2211
    %v2214 = vmax.f32 %v2213, 0.0
    %v2215 = vadd.f32 %v2214, 1e-05
    %v2216 = vrsqrt.pop %v2215
    %v2219 = vunpack.c.l.s4 1966171168
    %v2220 = vunpack.c.0.s8 %v2219
    %v2221 = vlaneseq
    %v2222 = vshrl.u32 %v2221, 7
    %v2223 = vsub.s32 %v2220, %v2222
    %v2224 = vrot.slane %v2216, %v2223
    %v2225 = vcombine.high %v2224, %v2224
    %v2227 = vunpack.c.l.s4 1966171168
    %v2228 = vunpack.c.0.s8 %v2227
    %v2229 = vlaneseq
    %v2230 = vshrl.u32 %v2229, 7
    %v2231 = vsub.s32 %v2228, %v2230
    %v2232 = vrot.slane %v2225, %v2231
    %v2234 = vmul.f32 %v1523, %v2232
    %v2235 = vmul.f32 %v2206, %v2234
    %v2236 = vsub.f32 %v1524, %v2235
    %v2238 = vlaneseq
    %v2239 = vshrl.u32 %v2238, 7
    %v2240 = vsub.s32 0, %v2239
    %v2241 = vrot.slane %v2234, %v2240
    %v2243 = vmul.f32 %v1541, %v2241
    %v2244 = vmul.f32 %v1542, %v2241
    %v2245 = vmul.f32 %v1543, %v2241
    %v2246 = vmul.f32 %v1544, %v2241
    %v2248 = vlaneseq
    %v2249 = vshrl.u32 %v2248, 7
    %v2250 = vsub.s32 0, %v2249
    %v2251 = vrot.slane %v2236, %v2250
    %v2253 = vadd.f32 %v2243, %v2251
    %v2254 = vadd.f32 %v2244, %v2251
    %v2255 = vadd.f32 %v2245, %v2251
    %v2256 = vadd.f32 %v2246, %v2251
    %2257 = vst [vmem:[#allocation12] sm:$0xff] %v2253
    %2258 = vst [vmem:[#allocation12 + $0x8] sm:$0xff] %v2254
    %2259 = vst [vmem:[#allocation12 + $0x10] sm:$0xff] %v2255
    %2260 = vst [vmem:[#allocation12 + $0x18] sm:$0xff] %v2256
    %v2265 = vcombine.high %v2253, %v2253
    %v2266 = vcombine.high %v2254, %v2254
    %v2267 = vcombine.high %v2255, %v2255
    %v2268 = vcombine.high %v2256, %v2256
    %v2273 = vrot.slane %v2253, 6
    %v2274 = vrot.slane %v2273, 4
    %v2275 = vrot.slane %v2265, 6
    %v2276 = vrot.slane %v2275, 4
    %v2277 = vrot.slane %v2254, 6
    %v2278 = vrot.slane %v2277, 4
    %v2279 = vrot.slane %v2266, 6
    %v2280 = vrot.slane %v2279, 4
    %v2281 = vrot.slane %v2255, 6
    %v2282 = vrot.slane %v2281, 4
    %v2283 = vrot.slane %v2267, 6
    %v2284 = vrot.slane %v2283, 4
    %v2285 = vrot.slane %v2256, 6
    %v2286 = vrot.slane %v2285, 4
    %v2287 = vrot.slane %v2268, 6
    %v2288 = vrot.slane %v2287, 4
    %v2297 = vmax.f32 %v2253, %v2274
    %v2298 = vmax.f32 %v2265, %v2276
    %v2299 = vmax.f32 %v2254, %v2278
    %v2300 = vmax.f32 %v2266, %v2280
    %v2301 = vmax.f32 %v2255, %v2282
    %v2302 = vmax.f32 %v2267, %v2284
    %v2303 = vmax.f32 %v2256, %v2286
    %v2304 = vmax.f32 %v2268, %v2288
    %v2313 = vcombine.low %v2297, %v2298
    %v2314 = vcombine.low %v2299, %v2300
    %v2316 = vunpack.c.l.s4 1983009808
    %v2317 = vunpack.c.0.s8 %v2316
    %v2318 = vlaneseq
    %v2319 = vshrl.u32 %v2318, 7
    %v2320 = vsub.s32 %v2317, %v2319
    %v2321 = vrot.slane %v2313, %v2320
    %v2323 = vunpack.c.l.s4 1983009808
    %v2324 = vunpack.c.0.s8 %v2323
    %v2325 = vlaneseq
    %v2326 = vshrl.u32 %v2325, 7
    %v2327 = vsub.s32 %v2324, %v2326
    %v2328 = vrot.slane %v2314, %v2327
    %v2329 = vcombine.low %v2321, %v2328
    %v2330 = vcombine.low %v2301, %v2302
    %v2331 = vcombine.low %v2303, %v2304
    %v2333 = vunpack.c.l.s4 1983009808
    %v2334 = vunpack.c.0.s8 %v2333
    %v2335 = vlaneseq
    %v2336 = vshrl.u32 %v2335, 7
    %v2337 = vsub.s32 %v2334, %v2336
    %v2338 = vrot.slane %v2330, %v2337
    %v2340 = vunpack.c.l.s4 1983009808
    %v2341 = vunpack.c.0.s8 %v2340
    %v2342 = vlaneseq
    %v2343 = vshrl.u32 %v2342, 7
    %v2344 = vsub.s32 %v2341, %v2343
    %v2345 = vrot.slane %v2331, %v2344
    %v2346 = vcombine.low %v2338, %v2345
    %2349 = vrot.lane.b32.xlu0 %v2329, 120
    %v2350 = vpop.permute.xlu0 %2349
    %2351 = vrot.lane.b32.xlu0 %v2346, 120
    %v2352 = vpop.permute.xlu0 %2351
    %v2355 = vcombine.high %v2350, %v2350
    %v2357 = vunpack.c.l.s4 1983009808
    %v2358 = vunpack.c.0.s8 %v2357
    %v2359 = vlaneseq
    %v2360 = vshrl.u32 %v2359, 7
    %v2361 = vsub.s32 %v2358, %v2360
    %v2362 = vrot.slane %v2350, %v2361
    %v2364 = vunpack.c.l.s4 1983009808
    %v2365 = vunpack.c.0.s8 %v2364
    %v2366 = vlaneseq
    %v2367 = vshrl.u32 %v2366, 7
    %v2368 = vsub.s32 %v2365, %v2367
    %v2369 = vrot.slane %v2355, %v2368
    %v2370 = vcombine.high %v2362, %v2362
    %v2371 = vcombine.high %v2369, %v2369
    %v2372 = vcombine.high %v2352, %v2352
    %v2374 = vunpack.c.l.s4 1983009808
    %v2375 = vunpack.c.0.s8 %v2374
    %v2376 = vlaneseq
    %v2377 = vshrl.u32 %v2376, 7
    %v2378 = vsub.s32 %v2375, %v2377
    %v2379 = vrot.slane %v2352, %v2378
    %v2381 = vunpack.c.l.s4 1983009808
    %v2382 = vunpack.c.0.s8 %v2381
    %v2383 = vlaneseq
    %v2384 = vshrl.u32 %v2383, 7
    %v2385 = vsub.s32 %v2382, %v2384
    %v2386 = vrot.slane %v2372, %v2385
    %v2387 = vcombine.high %v2379, %v2379
    %v2388 = vcombine.high %v2386, %v2386
    %v2397 = vmax.f32 %v2297, %v2362
    %v2398 = vmax.f32 %v2298, %v2370
    %v2399 = vmax.f32 %v2299, %v2369
    %v2400 = vmax.f32 %v2300, %v2371
    %v2401 = vmax.f32 %v2301, %v2379
    %v2402 = vmax.f32 %v2302, %v2387
    %v2403 = vmax.f32 %v2303, %v2386
    %v2404 = vmax.f32 %v2304, %v2388
    %v2413 = vcombine.low %v2397, %v2398
    %v2414 = vcombine.low %v2399, %v2400
    %v2416 = vunpack.c.l.s4 1983009808
    %v2417 = vunpack.c.0.s8 %v2416
    %v2418 = vlaneseq
    %v2419 = vshrl.u32 %v2418, 7
    %v2420 = vsub.s32 %v2417, %v2419
    %v2421 = vrot.slane %v2413, %v2420
    %v2423 = vunpack.c.l.s4 1983009808
    %v2424 = vunpack.c.0.s8 %v2423
    %v2425 = vlaneseq
    %v2426 = vshrl.u32 %v2425, 7
    %v2427 = vsub.s32 %v2424, %v2426
    %v2428 = vrot.slane %v2414, %v2427
    %v2429 = vcombine.low %v2421, %v2428
    %v2430 = vcombine.low %v2401, %v2402
    %v2431 = vcombine.low %v2403, %v2404
    %v2433 = vunpack.c.l.s4 1983009808
    %v2434 = vunpack.c.0.s8 %v2433
    %v2435 = vlaneseq
    %v2436 = vshrl.u32 %v2435, 7
    %v2437 = vsub.s32 %v2434, %v2436
    %v2438 = vrot.slane %v2430, %v2437
    %v2440 = vunpack.c.l.s4 1983009808
    %v2441 = vunpack.c.0.s8 %v2440
    %v2442 = vlaneseq
    %v2443 = vshrl.u32 %v2442, 7
    %v2444 = vsub.s32 %v2441, %v2443
    %v2445 = vrot.slane %v2431, %v2444
    %v2446 = vcombine.low %v2438, %v2445
    %2449 = vst [vmem:[#allocation13] sm:$0xff] %v2429
    %2450 = vst [vmem:[#allocation13 + $0x8] sm:$0xff] %v2446
    // Predicated region
    $region58: #{tpu_custom_call.1} parent=1 // pred_check
      _
    $region59: #{tpu_custom_call.1} parent=1 // pred_check_branch
      %2452 = sbr.rel (0) target = $region61
    $region60: #{tpu_custom_call.1} parent=1 // pred_region
      %s2454 = ssub.s32 512, 512
      %2455 = vsyncadd [#allocation6], %s2454
      %s2456 = sshll.u32 [#allocation12], 4
      %s2457 = int_to_ptr.vmem [resolvable:$true] %s2456
      %2462 = dma.vmem_to_hbm [thread:$0]  %s2457, 512, %s10, [#allocation6], 128, 128, 8
    $region61: #{tpu_custom_call.1} parent=1 // pred_fallthru
      _
    // Predicated region
    $region62: #{tpu_custom_call.1} parent=1 // pred_check
      _
    $region63: #{tpu_custom_call.1} parent=1 // pred_check_branch
      %2464 = sbr.rel (0) target = $region65
    $region64: #{tpu_custom_call.1} parent=1 // pred_region
      %s2466 = ssub.s32 256, 256
      %2467 = vsyncadd [#allocation14], %s2466
      %s2468 = sshll.u32 [#allocation13], 4
      %s2469 = int_to_ptr.vmem [resolvable:$true] %s2468
      %2474 = dma.vmem_to_hbm [thread:$0]  %s2469, 256, %s11, [#allocation14], 128, 128, 8
    $region65: #{tpu_custom_call.1} parent=1 // pred_fallthru
      _
    // Predicated region
    $region66: #{tpu_custom_call.1} parent=1 // pred_check
      _
    $region67: #{tpu_custom_call.1} parent=1 // pred_check_branch
      %2476 = sbr.rel (0) target = $region69
    $region68: #{tpu_custom_call.1} parent=1 // pred_region
      %2477 = dma.done [#allocation6], 512
    $region69: #{tpu_custom_call.1} parent=1 // pred_fallthru
      _
    // Predicated region
    $region70: #{tpu_custom_call.1} parent=1 // pred_check
      _
    $region71: #{tpu_custom_call.1} parent=1 // pred_check_branch
      %2479 = sbr.rel (0) target = $region73
    $region72: #{tpu_custom_call.1} parent=1 // pred_region
      %2480 = dma.done [#allocation14], 256
    $region73: #{tpu_custom_call.1} parent=1 // pred_fallthru
      _
    %2481 = vsyncpa [#allocation5], 1
    %2482 = vsyncpa [#allocation8], 1
    %2483 = vsyncpa [#allocation11], 1
    %2484 = vsyncpa [#allocation6], 1
    %2485 = vsyncpa [#allocation14], 1

</llo_original>
